<compile_context>
chip_gen: v5e
topology: v5e:2x2
jax: 0.10.0
libtpu: 0.0.40
codegen_flags: <defaults>
</compile_context>

<pallas_src>
import functools

import jax
import jax.numpy as jnp
from jax import lax
from jax.experimental import pallas as pl
from jax.experimental.pallas import tpu as pltpu

LANE = 128


# ----------------------------- small helpers -----------------------------

def _round_up(v, m):
    return ((v + m - 1) // m) * m


def _pad_axis(a, axis, target):
    pad = target - a.shape[axis]
    if pad <= 0:
        return a
    widths = [(0, 0)] * a.ndim
    widths[axis] = (0, pad)
    return jnp.pad(a, widths)


def _num_tensorcores():
    try:
        dev = jax.devices()[0]
        for attr in ("num_cores", "core_count"):
            v = getattr(dev, attr, None)
            if isinstance(v, int) and v > 0:
                return v
    except Exception:
        pass
    return 1


def _layer_norm(z, gamma, beta, d_real, eps=1e-5):
    # Lane-padding-safe LayerNorm: padded feature columns are zero and gamma /
    # beta are zero-padded, so the sums below equal sums over the real features;
    # normalizing by the true feature count keeps semantics exact and the
    # padded output columns stay exactly zero.
    inv_d = jnp.float32(1.0 / d_real)
    mu = jnp.sum(z, axis=-1, keepdims=True) * inv_d
    var = jnp.sum(z * z, axis=-1, keepdims=True) * inv_d - mu * mu
    return (z - mu) * lax.rsqrt(var + eps) * gamma + beta


def _gelu(x):
    # TODO(synk): PyTorch nn.GELU() is exact (erf); tanh approximation used for Mosaic-friendly lowering.
    c = jnp.float32(0.7978845608028654)  # sqrt(2/pi)
    return 0.5 * x * (1.0 + jnp.tanh(c * (x + 0.044715 * x * x * x)))


# --------------------------------- the kernel ----------------------------------

def _decoder_kernel(num_heads, head_dim_p, d_q_real, d_l_real, scale, cdt,
                    q_ref, x_ref,
                    lnq_g, lnq_b, lnc_g, lnc_b,
                    wq, wkv, wo, bo,
                    lnf_g, lnf_b, wf1, bf1, wf2, bf2,
                    wl, bl,
                    o_ref):
    bb, n, dqp = q_ref.shape
    _, m, dl = x_ref.shape
    nh, dhp = num_heads, head_dim_p
    inner = nh * dhp

    # Flatten batch into rows for the dense (non-attention) chain: fuller MXU tiles.
    q2 = q_ref[...].reshape(bb * n, dqp)                       # (bb*N, DQP)   f32
    c2 = x_ref[...].astype(jnp.float32).reshape(bb * m, dl)    # (bb*M, Dl)    f32

    # PreNorm LayerNorms (f32), padding-aware.
    qn = _layer_norm(q2, lnq_g[...], lnq_b[...], d_q_real)
    cn = _layer_norm(c2, lnc_g[...], lnc_b[...], d_l_real)

    # Projections: bf16 operands, f32 MXU accumulation. Scale folded into Q once.
    qp = jnp.dot(qn.astype(cdt), wq[...],
                 preferred_element_type=jnp.float32) * scale   # (bb*N, inner)
    kvp = jnp.dot(cn.astype(cdt), wkv[...],
                  preferred_element_type=jnp.float32)          # (bb*M, 2*inner)
    kp = kvp[:, :inner]     # 128-aligned lane split -> free view, no relayout
    vp = kvp[:, inner:]

    if nh == 1:
        qb = qp.reshape(bb, n, dhp)
        kb = kp.reshape(bb, m, dhp)
        vb = vp.reshape(bb, m, dhp)
        sim = lax.dot_general(qb.astype(cdt), kb.astype(cdt),
                              (((2,), (2,)), ((0,), (0,))),
                              preferred_element_type=jnp.float32)      # (bb, N, M)
        sim = sim - jnp.max(sim, axis=-1, keepdims=True)
        p = jnp.exp(sim)
        attn = p * pl.reciprocal(jnp.sum(p, axis=-1, keepdims=True), approx=True)
        ctx = lax.dot_general(attn.astype(cdt), vb.astype(cdt),
                              (((2,), (1,)), ((0,), (0,))),
                              preferred_element_type=jnp.float32)      # (bb, N, dhp)
        ctx2 = ctx.reshape(bb * n, dhp)
    else:
        # Two batch dims (batch, head) directly in dot_general: no Q/K/V transposes.
        q4 = qp.reshape(bb, n, nh, dhp)
        k4 = kp.reshape(bb, m, nh, dhp)
        v4 = vp.reshape(bb, m, nh, dhp)
        sim = lax.dot_general(q4.astype(cdt), k4.astype(cdt),
                              (((3,), (3,)), ((0, 2), (0, 2))),
                              preferred_element_type=jnp.float32)      # (bb, nh, N, M)
        sim = sim - jnp.max(sim, axis=-1, keepdims=True)
        p = jnp.exp(sim)
        attn = p * pl.reciprocal(jnp.sum(p, axis=-1, keepdims=True), approx=True)
        ctx = lax.dot_general(attn.astype(cdt), v4.astype(cdt),
                              (((3,), (1,)), ((0, 1), (0, 2))),
                              preferred_element_type=jnp.float32)      # (bb, nh, N, dhp)
        # Single relayout of the small context tensor before to_out.
        ctx2 = ctx.transpose(0, 2, 1, 3).reshape(bb * n, nh * dhp)

    # to_out projection (with bias).
    latents = jnp.dot(ctx2.astype(cdt), wo[...],
                      preferred_element_type=jnp.float32) + bo[...]    # (bb*N, DQP)

    # decoder feed-forward: latents + FF(LayerNorm(latents))
    ff_in = _layer_norm(latents, lnf_g[...], lnf_b[...], d_q_real)
    h1 = _gelu(jnp.dot(ff_in.astype(cdt), wf1[...],
                       preferred_element_type=jnp.float32) + bf1[...])
    ff = jnp.dot(h1.astype(cdt), wf2[...],
                 preferred_element_type=jnp.float32) + bf2[...]
    latents = latents + ff

    # to_logits (feature dim already padded to a multiple of 128 -> lane-dense store).
    logits = jnp.dot(latents.astype(cdt), wl[...],
                     preferred_element_type=jnp.float32) + bl[...]     # (bb*N, LP)
    o_ref[...] = logits.reshape(bb, n, -1).astype(o_ref.dtype)


# --------------------------------- the wrapper ----------------------------------

def perceiver_io_decoder(x, queries, params, *, num_heads, head_dim, mask=None,
                         compute_dtype=jnp.bfloat16):
    """x: (B, M, latent_dim) latents; queries: (N, Dq) or (B, N, Dq)."""
    if queries is None:
        return x
    if mask is not None:
        # TODO(synk): mask path of CrossAttention not implemented in the kernel.
        raise NotImplementedError("mask is not supported")

    b, m, dl = x.shape
    if queries.ndim == 2:
        queries = jnp.broadcast_to(queries[None], (b,) + queries.shape)
    n, dq = queries.shape[1], queries.shape[2]
    logits_dim = params["wl"].shape[1]
    ffh = params["wf1"].shape[1]
    scale = float(head_dim) ** -0.5

    nh, dh = num_heads, head_dim
    dqp = _round_up(dq, LANE)            # padded queries_dim
    dhp = _round_up(dh, LANE)            # padded per-head dim
    inner_p = nh * dhp
    ffp = _round_up(ffh, LANE)           # padded FF hidden
    lp = _round_up(logits_dim, LANE)     # padded logits dim
    cd = compute_dtype

    # ---- pad & cast weights (wrapper side) ----
    def pad_head_cols(w):   # (Din, nh*dh) -> (Din, nh*dhp), zero pad per head
        if dhp == dh:
            return w
        d_in = w.shape[0]
        return _pad_axis(w.reshape(d_in, nh, dh), 2, dhp).reshape(d_in, nh * dhp)

    def pad_head_rows(w):   # (nh*dh, Dout) -> (nh*dhp, Dout), zero pad per head
        if dhp == dh:
            return w
        d_out = w.shape[1]
        return _pad_axis(w.reshape(nh, dh, d_out), 1, dhp).reshape(nh * dhp, d_out)

    wq = _pad_axis(pad_head_cols(params["wq"]), 0, dqp)
    wkv = jnp.concatenate([pad_head_cols(params["wk"]),
                           pad_head_cols(params["wv"])], axis=1)  # split @ inner_p is 128-aligned
    wo = _pad_axis(pad_head_rows(params["wo"]), 1, dqp)
    bo = _pad_axis(params["bo"], 1, dqp)
    wf1 = _pad_axis(_pad_axis(params["wf1"], 0, dqp), 1, ffp)
    bf1 = _pad_axis(params["bf1"], 1, ffp)
    wf2 = _pad_axis(_pad_axis(params["wf2"], 0, ffp), 1, dqp)
    bf2 = _pad_axis(params["bf2"], 1, dqp)
    wl = _pad_axis(_pad_axis(params["wl"], 0, dqp), 1, lp)
    bl = _pad_axis(params["bl"], 1, lp)
    lnq_g = _pad_axis(params["lnq_g"], 1, dqp)
    lnq_b = _pad_axis(params["lnq_b"], 1, dqp)
    lnf_g = _pad_axis(params["lnf_g"], 1, dqp)
    lnf_b = _pad_axis(params["lnf_b"], 1, dqp)
    lnc_g, lnc_b = params["lnc_g"], params["lnc_b"]

    # Matmul weights ship in bf16 (MXU-native, half DMA/VMEM); LN params / biases f32.
    wq, wkv, wo, wf1, wf2, wl = (w.astype(cd) for w in (wq, wkv, wo, wf1, wf2, wl))

    weights = [lnq_g, lnq_b, lnc_g, lnc_b, wq, wkv, wo, bo,
               lnf_g, lnf_b, wf1, bf1, wf2, bf2, wl, bl]
    w_bytes = sum(int(w.size) * w.dtype.itemsize for w in weights)

    # Activations: lane-pad queries (small), ship the large latent context in bf16.
    q_in = _pad_axis(queries, 2, dqp).astype(jnp.float32)
    x_in = x.astype(cd)

    # ---- tile selection (VMEM budget + megacore gating) ----
    def est_vmem(bb, tn):
        rows_q, rows_c = bb * tn, bb * m
        acts = 0
        acts += 2 * bb * m * dl * x_in.dtype.itemsize            # x block (double-buffered)
        acts += 2 * bb * tn * dqp * 4                             # queries block
        acts += 2 * bb * tn * lp * 4                              # output block
        acts += rows_q * dqp * 4 + rows_c * dl * 4                # qn, cn
        acts += rows_q * inner_p * 4 + rows_c * 2 * inner_p * 4   # qp, kvp
        acts += 2 * bb * nh * tn * m * 4                          # sim + attn (f32)
        acts += rows_q * inner_p * 4                              # ctx
        acts += 3 * rows_q * dqp * 4 + rows_q * ffp * 4           # latents/ff_in/ff, h1
        acts += rows_q * lp * 4                                   # logits
        return acts + 2 * w_bytes                                 # const weights double-buffered

    budget = 12 << 20   # conservative per-block activation budget (fits v7x 64 MiB VMEM)
    bb, tn = b, n
    while est_vmem(bb, tn) > budget and tn % 16 == 0:  # keep tn a multiple of 8
        tn //= 2
    while est_vmem(bb, tn) > budget and bb % 2 == 0:
        bb //= 2
    # 2-way 'parallel' batch split only on multi-TC chips AND when each half still
    # presents >= 256 MXU rows; v5e/v6e always run a single whole-batch step.
    if _num_tensorcores() >= 2 and bb == b and b % 2 == 0 and (b // 2) * tn >= 256:
        bb = b // 2

    vmem_limit = int(min(64 << 20, max(32 << 20, 2 * est_vmem(bb, tn))))
    grid = (b // bb, n // tn)

    # ---- cost estimate (advisory, lets XLA schedule pad/cast ops around the call) ----
    rows_q, rows_c = b * n, b * m
    flops = 2 * (rows_q * dqp * inner_p
                 + rows_c * dl * 2 * inner_p
                 + b * nh * n * m * dhp
                 + b * nh * n * m * dhp
                 + rows_q * inner_p * dqp
                 + rows_q * dqp * ffp
                 + rows_q * ffp * dqp
                 + rows_q * dqp * lp)
    transcendentals = b * nh * n * m + rows_q * ffp + 2 * rows_q + rows_c + b * nh * n
    bytes_accessed = (int(q_in.size) * 4 + int(x_in.size) * x_in.dtype.itemsize
                      + w_bytes + b * n * lp * 4)
    cost = pl.CostEstimate(flops=int(flops), transcendentals=int(transcendentals),
                           bytes_accessed=int(bytes_accessed))

    # ---- specs ----
    def _const_spec(a):
        nd = a.ndim
        return pl.BlockSpec(a.shape, lambda i, j, nd=nd: (0,) * nd)

    in_specs = [
        pl.BlockSpec((bb, tn, dqp), lambda i, j: (i, j, 0)),   # queries
        pl.BlockSpec((bb, m, dl), lambda i, j: (i, 0, 0)),     # latent context
    ] + [_const_spec(w) for w in weights]

    kernel = functools.partial(_decoder_kernel, nh, dhp, dq, dl, scale, cd)

    out = pl.pallas_call(
        kernel,
        out_shape=jax.ShapeDtypeStruct((b, n, lp), jnp.float32),
        grid=grid,
        in_specs=in_specs,
        out_specs=pl.BlockSpec((bb, tn, lp), lambda i, j: (i, j, 0)),
        compiler_params=pltpu.CompilerParams(
            dimension_semantics=("parallel", "parallel"),
            vmem_limit_bytes=vmem_limit),
        cost_estimate=cost,
    )(q_in, x_in, *weights)

    if lp != logits_dim:
        out = out[..., :logits_dim]
    return out


# ------------------------------ pure-JAX reference -------------------------------

def _layer_norm_ref(z, gamma, beta, eps=1e-5):
    mu = jnp.mean(z, axis=-1, keepdims=True)
    var = jnp.mean(jnp.square(z - mu), axis=-1, keepdims=True)
    return (z - mu) * lax.rsqrt(var + eps) * gamma + beta


def reference_forward(x, queries, params, *, num_heads, head_dim):
    b = x.shape[0]
    if queries.ndim == 2:
        queries = jnp.broadcast_to(queries[None], (b,) + queries.shape)
    n, m = queries.shape[1], x.shape[1]
    scale = float(head_dim) ** -0.5

    qn = _layer_norm_ref(queries, params["lnq_g"], params["lnq_b"])
    cn = _layer_norm_ref(x, params["lnc_g"], params["lnc_b"])
    qp = qn @ params["wq"]
    kp = cn @ params["wk"]
    vp = cn @ params["wv"]
    qh = qp.reshape(b, n, num_heads, head_dim).transpose(0, 2, 1, 3)
    kh = kp.reshape(b, m, num_heads, head_dim).transpose(0, 2, 1, 3)
    vh = vp.reshape(b, m, num_heads, head_dim).transpose(0, 2, 1, 3)
    sim = jnp.einsum("bhid,bhjd->bhij", qh, kh) * scale
    attn = jax.nn.softmax(sim, axis=-1)
    out = jnp.einsum("bhij,bhjd->bhid", attn, vh).transpose(0, 2, 1, 3).reshape(b, n, -1)
    latents = out @ params["wo"] + params["bo"]
    ff_in = _layer_norm_ref(latents, params["lnf_g"], params["lnf_b"])
    ff = _gelu(ff_in @ params["wf1"] + params["bf1"]) @ params["wf2"] + params["bf2"]
    latents = latents + ff
    return latents @ params["wl"] + params["bl"]


# ------------------------------------ main ---------------------------------------

if __name__ == "__main__":
    # Small config consistent with the module (dim arg is unused in the decoder).
    B = 2                 # batch
    M = 16                # num_latents (context sequence length)
    LATENT_DIM = 64       # latent_dim
    N = 8                 # number of output queries
    QUERIES_DIM = 32      # queries_dim
    NUM_HEADS = 1         # num_cross_heads
    HEAD_DIM = 64         # cross_head_dim
    INNER = NUM_HEADS * HEAD_DIM
    FF_HIDDEN = QUERIES_DIM * 4
    LOGITS_DIM = 16       # logits_dim (decoder_ff=True, to_logits=Linear)

    key = jax.random.PRNGKey(0)
    ks = jax.random.split(key, 16)

    def w(k, shape, scale=0.05):
        return jax.random.normal(k, shape, dtype=jnp.float32) * scale

    params = {
        # PreNorm LayerNorms (gamma=1, beta=0 at init, stored as (1, D) rows)
        "lnq_g": jnp.ones((1, QUERIES_DIM), jnp.float32),
        "lnq_b": jnp.zeros((1, QUERIES_DIM), jnp.float32),
        "lnc_g": jnp.ones((1, LATENT_DIM), jnp.float32),
        "lnc_b": jnp.zeros((1, LATENT_DIM), jnp.float32),
        # CrossAttention: to_q (no bias), to_kv split into k / v (no bias), to_out (bias)
        "wq": w(ks[0], (QUERIES_DIM, INNER)),
        "wk": w(ks[1], (LATENT_DIM, INNER)),
        "wv": w(ks[2], (LATENT_DIM, INNER)),
        "wo": w(ks[3], (INNER, QUERIES_DIM)),
        "bo": w(ks[4], (1, QUERIES_DIM)),
        # decoder FeedForward PreNorm + Linear/GELU/Linear
        "lnf_g": jnp.ones((1, QUERIES_DIM), jnp.float32),
        "lnf_b": jnp.zeros((1, QUERIES_DIM), jnp.float32),
        "wf1": w(ks[5], (QUERIES_DIM, FF_HIDDEN)),
        "bf1": w(ks[6], (1, FF_HIDDEN)),
        "wf2": w(ks[7], (FF_HIDDEN, QUERIES_DIM)),
        "bf2": w(ks[8], (1, QUERIES_DIM)),
        # to_logits Linear
        "wl": w(ks[9], (QUERIES_DIM, LOGITS_DIM)),
        "bl": w(ks[10], (1, LOGITS_DIM)),
    }

    x = jax.random.normal(ks[11], (B, M, LATENT_DIM), dtype=jnp.float32)
    queries = jax.random.normal(ks[12], (N, QUERIES_DIM), dtype=jnp.float32)  # 'n d' -> 'b n d'

    out = perceiver_io_decoder(x, queries, params, num_heads=NUM_HEADS, head_dim=HEAD_DIM)
    out = jax.block_until_ready(out)

    ref = reference_forward(x, queries, params, num_heads=NUM_HEADS, head_dim=HEAD_DIM)
    assert out.shape == (B, N, LOGITS_DIM), out.shape
    # bf16 matmul operands / bf16 context DMA vs full-f32 reference -> loose tolerance.
    assert jnp.allclose(out, ref, atol=3e-2, rtol=3e-2), float(jnp.max(jnp.abs(out - ref)))

    print("KERNEL_OK")
</pallas_src>

<mosaic_0001>
module attributes {stable_mosaic.version = 11 : i64} {
  func.func @_decoder_kernel(%arg0: i32, %arg1: i32, %arg2: memref<2x8x128xf32, #tpu.memory_space<vmem>>, %arg3: memref<2x16x64xbf16, #tpu.memory_space<vmem>>, %arg4: memref<1x128xf32, #tpu.memory_space<vmem>>, %arg5: memref<1x128xf32, #tpu.memory_space<vmem>>, %arg6: memref<1x64xf32, #tpu.memory_space<vmem>>, %arg7: memref<1x64xf32, #tpu.memory_space<vmem>>, %arg8: memref<128x128xbf16, #tpu.memory_space<vmem>>, %arg9: memref<64x256xbf16, #tpu.memory_space<vmem>>, %arg10: memref<128x128xbf16, #tpu.memory_space<vmem>>, %arg11: memref<1x128xf32, #tpu.memory_space<vmem>>, %arg12: memref<1x128xf32, #tpu.memory_space<vmem>>, %arg13: memref<1x128xf32, #tpu.memory_space<vmem>>, %arg14: memref<128x128xbf16, #tpu.memory_space<vmem>>, %arg15: memref<1x128xf32, #tpu.memory_space<vmem>>, %arg16: memref<128x128xbf16, #tpu.memory_space<vmem>>, %arg17: memref<1x128xf32, #tpu.memory_space<vmem>>, %arg18: memref<128x128xbf16, #tpu.memory_space<vmem>>, %arg19: memref<1x128xf32, #tpu.memory_space<vmem>>, %arg20: memref<2x8x128xf32, #tpu.memory_space<vmem>>) attributes {dimension_semantics = [#tpu.dimension_semantics<parallel>, #tpu.dimension_semantics<parallel>], iteration_bounds = array<i64: 1, 1>, scalar_prefetch = 0 : i64, scratch_operands = 0 : i64, tpu.core_type = #tpu.core_type<tc>, window_params = [{transform_indices = @transform_0, window_bounds = array<i64: 2, 8, 128>}, {transform_indices = @transform_1, window_bounds = array<i64: 2, 16, 64>}, {pipeline_mode = #tpu.pipeline_mode<synchronous>, transform_indices = @transform_2, window_bounds = array<i64: 1, 128>}, {pipeline_mode = #tpu.pipeline_mode<synchronous>, transform_indices = @transform_3, window_bounds = array<i64: 1, 128>}, {pipeline_mode = #tpu.pipeline_mode<synchronous>, transform_indices = @transform_4, window_bounds = array<i64: 1, 64>}, {pipeline_mode = #tpu.pipeline_mode<synchronous>, transform_indices = @transform_5, window_bounds = array<i64: 1, 64>}, {pipeline_mode = #tpu.pipeline_mode<synchronous>, transform_indices = @transform_6, window_bounds = array<i64: 128, 128>}, {pipeline_mode = #tpu.pipeline_mode<synchronous>, transform_indices = @transform_7, window_bounds = array<i64: 64, 256>}, {pipeline_mode = #tpu.pipeline_mode<synchronous>, transform_indices = @transform_8, window_bounds = array<i64: 128, 128>}, {pipeline_mode = #tpu.pipeline_mode<synchronous>, transform_indices = @transform_9, window_bounds = array<i64: 1, 128>}, {pipeline_mode = #tpu.pipeline_mode<synchronous>, transform_indices = @transform_10, window_bounds = array<i64: 1, 128>}, {pipeline_mode = #tpu.pipeline_mode<synchronous>, transform_indices = @transform_11, window_bounds = array<i64: 1, 128>}, {pipeline_mode = #tpu.pipeline_mode<synchronous>, transform_indices = @transform_12, window_bounds = array<i64: 128, 128>}, {pipeline_mode = #tpu.pipeline_mode<synchronous>, transform_indices = @transform_13, window_bounds = array<i64: 1, 128>}, {pipeline_mode = #tpu.pipeline_mode<synchronous>, transform_indices = @transform_14, window_bounds = array<i64: 128, 128>}, {pipeline_mode = #tpu.pipeline_mode<synchronous>, transform_indices = @transform_15, window_bounds = array<i64: 1, 128>}, {pipeline_mode = #tpu.pipeline_mode<synchronous>, transform_indices = @transform_16, window_bounds = array<i64: 128, 128>}, {pipeline_mode = #tpu.pipeline_mode<synchronous>, transform_indices = @transform_17, window_bounds = array<i64: 1, 128>}, {transform_indices = @transform_18, window_bounds = array<i64: 2, 8, 128>}]} {
    %c0 = arith.constant 0 : index
    %c0_0 = arith.constant 0 : index
    %c0_1 = arith.constant 0 : index
    %0 = vector.load %arg2[%c0, %c0_0, %c0_1] : memref<2x8x128xf32, #tpu.memory_space<vmem>>, vector<2x8x128xf32>
    %1 = vector.shape_cast %0 : vector<2x8x128xf32> to vector<16x128xf32>
    %c0_2 = arith.constant 0 : index
    %c0_3 = arith.constant 0 : index
    %c0_4 = arith.constant 0 : index
    %2 = vector.load %arg3[%c0_2, %c0_3, %c0_4] : memref<2x16x64xbf16, #tpu.memory_space<vmem>>, vector<2x16x64xbf16>
    %3 = arith.extf %2 : vector<2x16x64xbf16> to vector<2x16x64xf32>
    %4 = vector.shape_cast %3 : vector<2x16x64xf32> to vector<32x64xf32>
    %c0_5 = arith.constant 0 : index
    %c0_6 = arith.constant 0 : index
    %5 = vector.load %arg4[%c0_5, %c0_6] : memref<1x128xf32, #tpu.memory_space<vmem>>, vector<1x128xf32>
    %c0_7 = arith.constant 0 : index
    %c0_8 = arith.constant 0 : index
    %6 = vector.load %arg5[%c0_7, %c0_8] : memref<1x128xf32, #tpu.memory_space<vmem>>, vector<1x128xf32>
    %cst = arith.constant dense<0.000000e+00> : vector<16xf32>
    %7 = vector.multi_reduction <add>, %1, %cst [1] : vector<16x128xf32> to vector<16xf32>
    %8 = vector.shape_cast %7 : vector<16xf32> to vector<16x1xf32>
    %cst_9 = arith.constant 3.125000e-02 : f32
    %9 = vector.broadcast %cst_9 : f32 to vector<16x1xf32>
    %10 = arith.mulf %8, %9 : vector<16x1xf32>
    %11 = arith.mulf %1, %1 : vector<16x128xf32>
    %cst_10 = arith.constant dense<0.000000e+00> : vector<16xf32>
    %12 = vector.multi_reduction <add>, %11, %cst_10 [1] : vector<16x128xf32> to vector<16xf32>
    %13 = vector.shape_cast %12 : vector<16xf32> to vector<16x1xf32>
    %cst_11 = arith.constant 3.125000e-02 : f32
    %14 = vector.broadcast %cst_11 : f32 to vector<16x1xf32>
    %15 = arith.mulf %13, %14 : vector<16x1xf32>
    %16 = arith.mulf %10, %10 : vector<16x1xf32>
    %17 = arith.subf %15, %16 : vector<16x1xf32>
    %18 = vector.broadcast %10 : vector<16x1xf32> to vector<16x128xf32>
    %19 = arith.subf %1, %18 : vector<16x128xf32>
    %cst_12 = arith.constant 9.99999974E-6 : f32
    %20 = vector.broadcast %cst_12 : f32 to vector<16x1xf32>
    %21 = arith.addf %17, %20 : vector<16x1xf32>
    %22 = math.rsqrt %21 : vector<16x1xf32>
    %23 = vector.broadcast %22 : vector<16x1xf32> to vector<16x128xf32>
    %24 = arith.mulf %19, %23 : vector<16x128xf32>
    %25 = vector.broadcast %5 : vector<1x128xf32> to vector<16x128xf32>
    %26 = arith.mulf %24, %25 : vector<16x128xf32>
    %27 = vector.broadcast %6 : vector<1x128xf32> to vector<16x128xf32>
    %28 = arith.addf %26, %27 : vector<16x128xf32>
    %c0_13 = arith.constant 0 : index
    %c0_14 = arith.constant 0 : index
    %29 = vector.load %arg6[%c0_13, %c0_14] : memref<1x64xf32, #tpu.memory_space<vmem>>, vector<1x64xf32>
    %c0_15 = arith.constant 0 : index
    %c0_16 = arith.constant 0 : index
    %30 = vector.load %arg7[%c0_15, %c0_16] : memref<1x64xf32, #tpu.memory_space<vmem>>, vector<1x64xf32>
    %cst_17 = arith.constant dense<0.000000e+00> : vector<32xf32>
    %31 = vector.multi_reduction <add>, %4, %cst_17 [1] : vector<32x64xf32> to vector<32xf32>
    %32 = vector.shape_cast %31 : vector<32xf32> to vector<32x1xf32>
    %cst_18 = arith.constant 1.562500e-02 : f32
    %33 = vector.broadcast %cst_18 : f32 to vector<32x1xf32>
    %34 = arith.mulf %32, %33 : vector<32x1xf32>
    %35 = arith.mulf %4, %4 : vector<32x64xf32>
    %cst_19 = arith.constant dense<0.000000e+00> : vector<32xf32>
    %36 = vector.multi_reduction <add>, %35, %cst_19 [1] : vector<32x64xf32> to vector<32xf32>
    %37 = vector.shape_cast %36 : vector<32xf32> to vector<32x1xf32>
    %cst_20 = arith.constant 1.562500e-02 : f32
    %38 = vector.broadcast %cst_20 : f32 to vector<32x1xf32>
    %39 = arith.mulf %37, %38 : vector<32x1xf32>
    %40 = arith.mulf %34, %34 : vector<32x1xf32>
    %41 = arith.subf %39, %40 : vector<32x1xf32>
    %42 = vector.broadcast %34 : vector<32x1xf32> to vector<32x64xf32>
    %43 = arith.subf %4, %42 : vector<32x64xf32>
    %cst_21 = arith.constant 9.99999974E-6 : f32
    %44 = vector.broadcast %cst_21 : f32 to vector<32x1xf32>
    %45 = arith.addf %41, %44 : vector<32x1xf32>
    %46 = math.rsqrt %45 : vector<32x1xf32>
    %47 = vector.broadcast %46 : vector<32x1xf32> to vector<32x64xf32>
    %48 = arith.mulf %43, %47 : vector<32x64xf32>
    %49 = vector.broadcast %29 : vector<1x64xf32> to vector<32x64xf32>
    %50 = arith.mulf %48, %49 : vector<32x64xf32>
    %51 = vector.broadcast %30 : vector<1x64xf32> to vector<32x64xf32>
    %52 = arith.addf %50, %51 : vector<32x64xf32>
    %53 = arith.truncf %28 : vector<16x128xf32> to vector<16x128xbf16>
    %c0_22 = arith.constant 0 : index
    %c0_23 = arith.constant 0 : index
    %54 = vector.load %arg8[%c0_22, %c0_23] : memref<128x128xbf16, #tpu.memory_space<vmem>>, vector<128x128xbf16>
    %cst_24 = arith.constant dense<0.000000e+00> : vector<16x128xf32>
    %55 = tpu.matmul %53, %54, %cst_24 {dimension_numbers = #tpu.dot_dimension_numbers<[1], [0], [0], [1], [0, 0, 1, 1], [], []>} : vector<16x128xbf16>, vector<128x128xbf16>, vector<16x128xf32> -> vector<16x128xf32>
    %cst_25 = arith.constant 1.250000e-01 : f32
    %56 = vector.broadcast %cst_25 : f32 to vector<16x128xf32>
    %57 = arith.mulf %55, %56 : vector<16x128xf32>
    %58 = arith.truncf %52 : vector<32x64xf32> to vector<32x64xbf16>
    %c0_26 = arith.constant 0 : index
    %c0_27 = arith.constant 0 : index
    %59 = vector.load %arg9[%c0_26, %c0_27] : memref<64x256xbf16, #tpu.memory_space<vmem>>, vector<64x256xbf16>
    %cst_28 = arith.constant dense<0.000000e+00> : vector<32x256xf32>
    %60 = tpu.matmul %58, %59, %cst_28 {dimension_numbers = #tpu.dot_dimension_numbers<[1], [0], [0], [1], [0, 0, 1, 1], [], []>} : vector<32x64xbf16>, vector<64x256xbf16>, vector<32x256xf32> -> vector<32x256xf32>
    %61 = vector.extract_strided_slice %60 {offsets = [0, 0], sizes = [32, 128], strides = [1, 1]} : vector<32x256xf32> to vector<32x128xf32>
    %62 = vector.extract_strided_slice %60 {offsets = [0, 128], sizes = [32, 128], strides = [1, 1]} : vector<32x256xf32> to vector<32x128xf32>
    %63 = vector.shape_cast %57 : vector<16x128xf32> to vector<2x8x128xf32>
    %64 = vector.shape_cast %61 : vector<32x128xf32> to vector<2x16x128xf32>
    %65 = vector.shape_cast %62 : vector<32x128xf32> to vector<2x16x128xf32>
    %66 = arith.truncf %63 : vector<2x8x128xf32> to vector<2x8x128xbf16>
    %67 = arith.truncf %64 : vector<2x16x128xf32> to vector<2x16x128xbf16>
    %cst_29 = arith.constant dense<0.000000e+00> : vector<2x8x16xf32>
    %68 = tpu.matmul %66, %67, %cst_29 {dimension_numbers = #tpu.dot_dimension_numbers<[2], [2], [1], [1], [0, 0, 0, 1, 1, 1], [0], [0]>} : vector<2x8x128xbf16>, vector<2x16x128xbf16>, vector<2x8x16xf32> -> vector<2x8x16xf32>
    %cst_30 = arith.constant dense<0xFF800000> : vector<2x8xf32>
    %69 = vector.multi_reduction <maximumf>, %68, %cst_30 [2] : vector<2x8x16xf32> to vector<2x8xf32>
    %70 = vector.shape_cast %69 : vector<2x8xf32> to vector<2x8x1xf32>
    %71 = vector.broadcast %70 : vector<2x8x1xf32> to vector<2x8x16xf32>
    %72 = arith.subf %68, %71 : vector<2x8x16xf32>
    %73 = math.exp %72 : vector<2x8x16xf32>
    %cst_31 = arith.constant dense<0.000000e+00> : vector<2x8xf32>
    %74 = vector.multi_reduction <add>, %73, %cst_31 [2] : vector<2x8x16xf32> to vector<2x8xf32>
    %75 = vector.shape_cast %74 : vector<2x8xf32> to vector<2x8x1xf32>
    %76 = tpu.reciprocal %75 {approx = true} : vector<2x8x1xf32> -> vector<2x8x1xf32>
    %77 = vector.broadcast %76 : vector<2x8x1xf32> to vector<2x8x16xf32>
    %78 = arith.mulf %73, %77 : vector<2x8x16xf32>
    %79 = arith.truncf %78 : vector<2x8x16xf32> to vector<2x8x16xbf16>
    %80 = arith.truncf %65 : vector<2x16x128xf32> to vector<2x16x128xbf16>
    %cst_32 = arith.constant dense<0.000000e+00> : vector<2x8x128xf32>
    %81 = tpu.matmul %79, %80, %cst_32 {dimension_numbers = #tpu.dot_dimension_numbers<[2], [1], [1], [2], [0, 0, 0, 1, 1, 2], [0], [0]>} : vector<2x8x16xbf16>, vector<2x16x128xbf16>, vector<2x8x128xf32> -> vector<2x8x128xf32>
    %82 = vector.shape_cast %81 : vector<2x8x128xf32> to vector<16x128xf32>
    %83 = arith.truncf %82 : vector<16x128xf32> to vector<16x128xbf16>
    %c0_33 = arith.constant 0 : index
    %c0_34 = arith.constant 0 : index
    %84 = vector.load %arg10[%c0_33, %c0_34] : memref<128x128xbf16, #tpu.memory_space<vmem>>, vector<128x128xbf16>
    %cst_35 = arith.constant dense<0.000000e+00> : vector<16x128xf32>
    %85 = tpu.matmul %83, %84, %cst_35 {dimension_numbers = #tpu.dot_dimension_numbers<[1], [0], [0], [1], [0, 0, 1, 1], [], []>} : vector<16x128xbf16>, vector<128x128xbf16>, vector<16x128xf32> -> vector<16x128xf32>
    %c0_36 = arith.constant 0 : index
    %c0_37 = arith.constant 0 : index
    %86 = vector.load %arg11[%c0_36, %c0_37] : memref<1x128xf32, #tpu.memory_space<vmem>>, vector<1x128xf32>
    %87 = vector.broadcast %86 : vector<1x128xf32> to vector<16x128xf32>
    %88 = arith.addf %85, %87 : vector<16x128xf32>
    %c0_38 = arith.constant 0 : index
    %c0_39 = arith.constant 0 : index
    %89 = vector.load %arg12[%c0_38, %c0_39] : memref<1x128xf32, #tpu.memory_space<vmem>>, vector<1x128xf32>
    %c0_40 = arith.constant 0 : index
    %c0_41 = arith.constant 0 : index
    %90 = vector.load %arg13[%c0_40, %c0_41] : memref<1x128xf32, #tpu.memory_space<vmem>>, vector<1x128xf32>
    %cst_42 = arith.constant dense<0.000000e+00> : vector<16xf32>
    %91 = vector.multi_reduction <add>, %88, %cst_42 [1] : vector<16x128xf32> to vector<16xf32>
    %92 = vector.shape_cast %91 : vector<16xf32> to vector<16x1xf32>
    %cst_43 = arith.constant 3.125000e-02 : f32
    %93 = vector.broadcast %cst_43 : f32 to vector<16x1xf32>
    %94 = arith.mulf %92, %93 : vector<16x1xf32>
    %95 = arith.mulf %88, %88 : vector<16x128xf32>
    %cst_44 = arith.constant dense<0.000000e+00> : vector<16xf32>
    %96 = vector.multi_reduction <add>, %95, %cst_44 [1] : vector<16x128xf32> to vector<16xf32>
    %97 = vector.shape_cast %96 : vector<16xf32> to vector<16x1xf32>
    %cst_45 = arith.constant 3.125000e-02 : f32
    %98 = vector.broadcast %cst_45 : f32 to vector<16x1xf32>
    %99 = arith.mulf %97, %98 : vector<16x1xf32>
    %100 = arith.mulf %94, %94 : vector<16x1xf32>
    %101 = arith.subf %99, %100 : vector<16x1xf32>
    %102 = vector.broadcast %94 : vector<16x1xf32> to vector<16x128xf32>
    %103 = arith.subf %88, %102 : vector<16x128xf32>
    %cst_46 = arith.constant 9.99999974E-6 : f32
    %104 = vector.broadcast %cst_46 : f32 to vector<16x1xf32>
    %105 = arith.addf %101, %104 : vector<16x1xf32>
    %106 = math.rsqrt %105 : vector<16x1xf32>
    %107 = vector.broadcast %106 : vector<16x1xf32> to vector<16x128xf32>
    %108 = arith.mulf %103, %107 : vector<16x128xf32>
    %109 = vector.broadcast %89 : vector<1x128xf32> to vector<16x128xf32>
    %110 = arith.mulf %108, %109 : vector<16x128xf32>
    %111 = vector.broadcast %90 : vector<1x128xf32> to vector<16x128xf32>
    %112 = arith.addf %110, %111 : vector<16x128xf32>
    %113 = arith.truncf %112 : vector<16x128xf32> to vector<16x128xbf16>
    %c0_47 = arith.constant 0 : index
    %c0_48 = arith.constant 0 : index
    %114 = vector.load %arg14[%c0_47, %c0_48] : memref<128x128xbf16, #tpu.memory_space<vmem>>, vector<128x128xbf16>
    %cst_49 = arith.constant dense<0.000000e+00> : vector<16x128xf32>
    %115 = tpu.matmul %113, %114, %cst_49 {dimension_numbers = #tpu.dot_dimension_numbers<[1], [0], [0], [1], [0, 0, 1, 1], [], []>} : vector<16x128xbf16>, vector<128x128xbf16>, vector<16x128xf32> -> vector<16x128xf32>
    %c0_50 = arith.constant 0 : index
    %c0_51 = arith.constant 0 : index
    %116 = vector.load %arg15[%c0_50, %c0_51] : memref<1x128xf32, #tpu.memory_space<vmem>>, vector<1x128xf32>
    %117 = vector.broadcast %116 : vector<1x128xf32> to vector<16x128xf32>
    %118 = arith.addf %115, %117 : vector<16x128xf32>
    %cst_52 = arith.constant 5.000000e-01 : f32
    %119 = vector.broadcast %cst_52 : f32 to vector<16x128xf32>
    %120 = arith.mulf %119, %118 : vector<16x128xf32>
    %cst_53 = arith.constant 4.471500e-02 : f32
    %121 = vector.broadcast %cst_53 : f32 to vector<16x128xf32>
    %122 = arith.mulf %121, %118 : vector<16x128xf32>
    %123 = arith.mulf %122, %118 : vector<16x128xf32>
    %124 = arith.mulf %123, %118 : vector<16x128xf32>
    %125 = arith.addf %118, %124 : vector<16x128xf32>
    %cst_54 = arith.constant 0.797884583 : f32
    %126 = vector.broadcast %cst_54 : f32 to vector<16x128xf32>
    %127 = arith.mulf %126, %125 : vector<16x128xf32>
    %128 = math.tanh %127 : vector<16x128xf32>
    %cst_55 = arith.constant 1.000000e+00 : f32
    %129 = vector.broadcast %cst_55 : f32 to vector<16x128xf32>
    %130 = arith.addf %129, %128 : vector<16x128xf32>
    %131 = arith.mulf %120, %130 : vector<16x128xf32>
    %132 = arith.truncf %131 : vector<16x128xf32> to vector<16x128xbf16>
    %c0_56 = arith.constant 0 : index
    %c0_57 = arith.constant 0 : index
    %133 = vector.load %arg16[%c0_56, %c0_57] : memref<128x128xbf16, #tpu.memory_space<vmem>>, vector<128x128xbf16>
    %cst_58 = arith.constant dense<0.000000e+00> : vector<16x128xf32>
    %134 = tpu.matmul %132, %133, %cst_58 {dimension_numbers = #tpu.dot_dimension_numbers<[1], [0], [0], [1], [0, 0, 1, 1], [], []>} : vector<16x128xbf16>, vector<128x128xbf16>, vector<16x128xf32> -> vector<16x128xf32>
    %c0_59 = arith.constant 0 : index
    %c0_60 = arith.constant 0 : index
    %135 = vector.load %arg17[%c0_59, %c0_60] : memref<1x128xf32, #tpu.memory_space<vmem>>, vector<1x128xf32>
    %136 = vector.broadcast %135 : vector<1x128xf32> to vector<16x128xf32>
    %137 = arith.addf %134, %136 : vector<16x128xf32>
    %138 = arith.addf %88, %137 : vector<16x128xf32>
    %139 = arith.truncf %138 : vector<16x128xf32> to vector<16x128xbf16>
    %c0_61 = arith.constant 0 : index
    %c0_62 = arith.constant 0 : index
    %140 = vector.load %arg18[%c0_61, %c0_62] : memref<128x128xbf16, #tpu.memory_space<vmem>>, vector<128x128xbf16>
    %cst_63 = arith.constant dense<0.000000e+00> : vector<16x128xf32>
    %141 = tpu.matmul %139, %140, %cst_63 {dimension_numbers = #tpu.dot_dimension_numbers<[1], [0], [0], [1], [0, 0, 1, 1], [], []>} : vector<16x128xbf16>, vector<128x128xbf16>, vector<16x128xf32> -> vector<16x128xf32>
    %c0_64 = arith.constant 0 : index
    %c0_65 = arith.constant 0 : index
    %142 = vector.load %arg19[%c0_64, %c0_65] : memref<1x128xf32, #tpu.memory_space<vmem>>, vector<1x128xf32>
    %143 = vector.broadcast %142 : vector<1x128xf32> to vector<16x128xf32>
    %144 = arith.addf %141, %143 : vector<16x128xf32>
    %145 = vector.shape_cast %144 : vector<16x128xf32> to vector<2x8x128xf32>
    %c0_66 = arith.constant 0 : index
    %c0_67 = arith.constant 0 : index
    %c0_68 = arith.constant 0 : index
    %146 = vector.load %arg20[%c0_66, %c0_67, %c0_68] : memref<2x8x128xf32, #tpu.memory_space<vmem>>, vector<2x8x128xf32>
    tpu.vector_store %arg20[%c0_66, %c0_67, %c0_68], %145 {strides = array<i32>} : memref<2x8x128xf32, #tpu.memory_space<vmem>>, vector<2x8x128xf32>,
    return
  }
  func.func @transform_0(%arg0: i32, %arg1: i32) -> (i32, i32, i32) {
    %c0_i32 = arith.constant 0 : i32
    %c0_i32_0 = arith.constant 0 : i32
    return %arg0, %arg1, %c0_i32 : i32, i32, i32
  }
  func.func @transform_1(%arg0: i32, %arg1: i32) -> (i32, i32, i32) {
    %c0_i32 = arith.constant 0 : i32
    %c0_i32_0 = arith.constant 0 : i32
    %c0_i32_1 = arith.constant 0 : i32
    return %arg0, %c0_i32, %c0_i32_0 : i32, i32, i32
  }
  func.func @transform_2(%arg0: i32, %arg1: i32) -> (i32, i32) {
    %c0_i32 = arith.constant 0 : i32
    %c0_i32_0 = arith.constant 0 : i32
    %c0_i32_1 = arith.constant 0 : i32
    return %c0_i32, %c0_i32_0 : i32, i32
  }
  func.func @transform_3(%arg0: i32, %arg1: i32) -> (i32, i32) {
    %c0_i32 = arith.constant 0 : i32
    %c0_i32_0 = arith.constant 0 : i32
    %c0_i32_1 = arith.constant 0 : i32
    return %c0_i32, %c0_i32_0 : i32, i32
  }
  func.func @transform_4(%arg0: i32, %arg1: i32) -> (i32, i32) {
    %c0_i32 = arith.constant 0 : i32
    %c0_i32_0 = arith.constant 0 : i32
    %c0_i32_1 = arith.constant 0 : i32
    return %c0_i32, %c0_i32_0 : i32, i32
  }
  func.func @transform_5(%arg0: i32, %arg1: i32) -> (i32, i32) {
    %c0_i32 = arith.constant 0 : i32
    %c0_i32_0 = arith.constant 0 : i32
    %c0_i32_1 = arith.constant 0 : i32
    return %c0_i32, %c0_i32_0 : i32, i32
  }
  func.func @transform_6(%arg0: i32, %arg1: i32) -> (i32, i32) {
    %c0_i32 = arith.constant 0 : i32
    %c0_i32_0 = arith.constant 0 : i32
    %c0_i32_1 = arith.constant 0 : i32
    return %c0_i32, %c0_i32_0 : i32, i32
  }
  func.func @transform_7(%arg0: i32, %arg1: i32) -> (i32, i32) {
    %c0_i32 = arith.constant 0 : i32
    %c0_i32_0 = arith.constant 0 : i32
    %c0_i32_1 = arith.constant 0 : i32
    return %c0_i32, %c0_i32_0 : i32, i32
  }
  func.func @transform_8(%arg0: i32, %arg1: i32) -> (i32, i32) {
    %c0_i32 = arith.constant 0 : i32
    %c0_i32_0 = arith.constant 0 : i32
    %c0_i32_1 = arith.constant 0 : i32
    return %c0_i32, %c0_i32_0 : i32, i32
  }
  func.func @transform_9(%arg0: i32, %arg1: i32) -> (i32, i32) {
    %c0_i32 = arith.constant 0 : i32
    %c0_i32_0 = arith.constant 0 : i32
    %c0_i32_1 = arith.constant 0 : i32
    return %c0_i32, %c0_i32_0 : i32, i32
  }
  func.func @transform_10(%arg0: i32, %arg1: i32) -> (i32, i32) {
    %c0_i32 = arith.constant 0 : i32
    %c0_i32_0 = arith.constant 0 : i32
    %c0_i32_1 = arith.constant 0 : i32
    return %c0_i32, %c0_i32_0 : i32, i32
  }
  func.func @transform_11(%arg0: i32, %arg1: i32) -> (i32, i32) {
    %c0_i32 = arith.constant 0 : i32
    %c0_i32_0 = arith.constant 0 : i32
    %c0_i32_1 = arith.constant 0 : i32
    return %c0_i32, %c0_i32_0 : i32, i32
  }
  func.func @transform_12(%arg0: i32, %arg1: i32) -> (i32, i32) {
    %c0_i32 = arith.constant 0 : i32
    %c0_i32_0 = arith.constant 0 : i32
    %c0_i32_1 = arith.constant 0 : i32
    return %c0_i32, %c0_i32_0 : i32, i32
  }
  func.func @transform_13(%arg0: i32, %arg1: i32) -> (i32, i32) {
    %c0_i32 = arith.constant 0 : i32
    %c0_i32_0 = arith.constant 0 : i32
    %c0_i32_1 = arith.constant 0 : i32
    return %c0_i32, %c0_i32_0 : i32, i32
  }
  func.func @transform_14(%arg0: i32, %arg1: i32) -> (i32, i32) {
    %c0_i32 = arith.constant 0 : i32
    %c0_i32_0 = arith.constant 0 : i32
    %c0_i32_1 = arith.constant 0 : i32
    return %c0_i32, %c0_i32_0 : i32, i32
  }
  func.func @transform_15(%arg0: i32, %arg1: i32) -> (i32, i32) {
    %c0_i32 = arith.constant 0 : i32
    %c0_i32_0 = arith.constant 0 : i32
    %c0_i32_1 = arith.constant 0 : i32
    return %c0_i32, %c0_i32_0 : i32, i32
  }
  func.func @transform_16(%arg0: i32, %arg1: i32) -> (i32, i32) {
    %c0_i32 = arith.constant 0 : i32
    %c0_i32_0 = arith.constant 0 : i32
    %c0_i32_1 = arith.constant 0 : i32
    return %c0_i32, %c0_i32_0 : i32, i32
  }
  func.func @transform_17(%arg0: i32, %arg1: i32) -> (i32, i32) {
    %c0_i32 = arith.constant 0 : i32
    %c0_i32_0 = arith.constant 0 : i32
    %c0_i32_1 = arith.constant 0 : i32
    return %c0_i32, %c0_i32_0 : i32, i32
  }
  func.func @transform_18(%arg0: i32, %arg1: i32) -> (i32, i32, i32) {
    %c0_i32 = arith.constant 0 : i32
    %c0_i32_0 = arith.constant 0 : i32
    return %arg0, %arg1, %c0_i32 : i32, i32, i32
  }
}

</mosaic_0001>

<llo_original>
// kernel: tpu_custom_call.1
$region0: #{tpu_custom_call.1}
  #allocation0 [shape = 'u32[]', space=smem, size = 0x4, offset = 0x4, fixed_abs, tag = 'smem constant byte address 0x4 - core index']
  #allocation1 [shape = 'u32[72,128]{1,0:T(1,128)}', space=vmem, size = 0x9000, scoped, tag = 'internal scratch']
  %s0 = inlined_call_operand.hbm [shape: f32[2,8,128], index: 0, kind: input, shape index: {}]
  %s1 = inlined_call_operand.hbm [shape: bf16[2,16,64], index: 1, kind: input, shape index: {}]
  %s2 = inlined_call_operand.vmem [shape: f32[1,128], index: 2, kind: input, shape index: {}]
  %s3 = inlined_call_operand.vmem [shape: f32[1,128], index: 3, kind: input, shape index: {}]
  %s4 = inlined_call_operand.vmem [shape: f32[1,64], index: 4, kind: input, shape index: {}]
  %s5 = inlined_call_operand.vmem [shape: f32[1,64], index: 5, kind: input, shape index: {}]
  %s6 = inlined_call_operand.hbm [shape: bf16[128,128], index: 6, kind: input, shape index: {}]
  %s7 = inlined_call_operand.hbm [shape: bf16[64,256], index: 7, kind: input, shape index: {}]
  %s8 = inlined_call_operand.hbm [shape: bf16[128,128], index: 8, kind: input, shape index: {}]
  %s9 = inlined_call_operand.vmem [shape: f32[1,128], index: 9, kind: input, shape index: {}]
  %s10 = inlined_call_operand.vmem [shape: f32[1,128], index: 10, kind: input, shape index: {}]
  %s11 = inlined_call_operand.vmem [shape: f32[1,128], index: 11, kind: input, shape index: {}]
  %s12 = inlined_call_operand.hbm [shape: bf16[128,128], index: 12, kind: input, shape index: {}]
  %s13 = inlined_call_operand.vmem [shape: f32[1,128], index: 13, kind: input, shape index: {}]
  %s14 = inlined_call_operand.hbm [shape: bf16[128,128], index: 14, kind: input, shape index: {}]
  %s15 = inlined_call_operand.vmem [shape: f32[1,128], index: 15, kind: input, shape index: {}]
  %s16 = inlined_call_operand.hbm [shape: bf16[128,128], index: 16, kind: input, shape index: {}]
  %s17 = inlined_call_operand.vmem [shape: f32[1,128], index: 17, kind: input, shape index: {}]
  %s18 = inlined_call_operand.hbm [shape: f32[2,8,128], index: 18, kind: output, shape index: {}]
  %s19 = sld [smem:[#allocation0]]
  $region114: #{tpu_custom_call.1} parent=0
    _
  %s21 = ssub.s32 1, %s19
  %s22 = scalar_select 0, %s21, %s19
  $region1: #{tpu_custom_call.1} parent=0
    #allocation2 [shape = 'u8[8192]{0}', space=vmem, size = 0x2000, scoped, tag = 'input window, operand 0, single buffered']
    #allocation3 [shape = 's32[1]{0}', space=sflag, size = 0x4, scoped, tag = 'scoped memory for tpu_custom_call.1']
    #allocation4 [shape = 's32[1]{0}', space=sflag, size = 0x4, scoped, tag = 'scoped memory for tpu_custom_call.1']
    #allocation5 [shape = 'u8[8192]{0}', space=vmem, size = 0x2000, scoped, tag = 'input window, operand 1, single buffered']
    #allocation6 [shape = 's32[1]{0}', space=sflag, size = 0x4, scoped, tag = 'scoped memory for tpu_custom_call.1']
    #allocation7 [shape = 'u8[32768]{0}', space=vmem, size = 0x8000, scoped, tag = 'input window, operand 6, single buffered']
    #allocation8 [shape = 'u8[32768]{0}', space=vmem, size = 0x8000, scoped, tag = 'input window, operand 7, single buffered']
    #allocation9 [shape = 's32[1]{0}', space=sflag, size = 0x4, scoped, tag = 'scoped memory for tpu_custom_call.1']
    #allocation10 [shape = 'u8[32768]{0}', space=vmem, size = 0x8000, scoped, tag = 'input window, operand 8, single buffered']
    #allocation11 [shape = 'u8[32768]{0}', space=vmem, size = 0x8000, scoped, tag = 'input window, operand 12, single buffered']
    #allocation12 [shape = 's32[1]{0}', space=sflag, size = 0x4, scoped, tag = 'scoped memory for tpu_custom_call.1']
    #allocation13 [shape = 'u8[32768]{0}', space=vmem, size = 0x8000, scoped, tag = 'input window, operand 14, single buffered']
    #allocation14 [shape = 'u8[32768]{0}', space=vmem, size = 0x8000, scoped, tag = 'input window, operand 16, single buffered']
    #allocation15 [shape = 's32[1]{0}', space=sflag, size = 0x4, scoped, tag = 'scoped memory for tpu_custom_call.1']
    #allocation16 [shape = 'u8[8192]{0}', space=vmem, size = 0x2000, scoped, tag = 'output window, operand 0, single buffered']
    %23 = vsyncpa [#allocation3], 0
    %24 = vsyncpa [#allocation6], 0
    %25 = vsyncpa [#allocation9], 0
    %26 = vsyncpa [#allocation12], 0
    %27 = vsyncpa [#allocation15], 0
    %28 = vsyncpa [#allocation4], 0
    // Predicated region
    $region2: #{tpu_custom_call.1} parent=1 // pred_check
      _
    $region3: #{tpu_custom_call.1} parent=1 // pred_check_branch
      %30 = sbr.rel (0) target = $region5
    $region4: #{tpu_custom_call.1} parent=1 // pred_region
      %32 = vsyncadd [#allocation3], 0
      %s33 = sshll.u32 %s0, 4
      %s34 = int_to_ptr.hbm [resolvable:$true] %s33
      %s35 = sshll.u32 [#allocation2], 4
      %s36 = int_to_ptr.vmem [resolvable:$true] %s35
      %41 = dma.hbm_to_vmem [thread:$0]  %s34, 256, %s36, [#allocation3], 128, 128, 8
    $region5: #{tpu_custom_call.1} parent=1 // pred_fallthru
      _
    // Predicated region
    $region6: #{tpu_custom_call.1} parent=1 // pred_check
      _
    $region7: #{tpu_custom_call.1} parent=1 // pred_check_branch
      %43 = sbr.rel (0) target = $region9
    $region8: #{tpu_custom_call.1} parent=1 // pred_region
      %45 = vsyncadd [#allocation6], 0
      %s46 = sshll.u32 %s1, 4
      %s47 = int_to_ptr.hbm [resolvable:$true] %s46
      %s48 = sshll.u32 [#allocation5], 4
      %s49 = int_to_ptr.vmem [resolvable:$true] %s48
      %54 = dma.hbm_to_vmem [thread:$0]  %s47, 256, %s49, [#allocation6], 64, 64, 4
    $region9: #{tpu_custom_call.1} parent=1 // pred_fallthru
      _
    // Predicated region
    $region10: #{tpu_custom_call.1} parent=1 // pred_check
      _
    $region11: #{tpu_custom_call.1} parent=1 // pred_check_branch
      %56 = sbr.rel (0) target = $region13
    $region12: #{tpu_custom_call.1} parent=1 // pred_region
      _
    $region13: #{tpu_custom_call.1} parent=1 // pred_fallthru
      _
    // Predicated region
    $region14: #{tpu_custom_call.1} parent=1 // pred_check
      _
    $region15: #{tpu_custom_call.1} parent=1 // pred_check_branch
      %58 = sbr.rel (0) target = $region17
    $region16: #{tpu_custom_call.1} parent=1 // pred_region
      _
    $region17: #{tpu_custom_call.1} parent=1 // pred_fallthru
      _
    // Predicated region
    $region18: #{tpu_custom_call.1} parent=1 // pred_check
      _
    $region19: #{tpu_custom_call.1} parent=1 // pred_check_branch
      %60 = sbr.rel (0) target = $region21
    $region20: #{tpu_custom_call.1} parent=1 // pred_region
      _
    $region21: #{tpu_custom_call.1} parent=1 // pred_fallthru
      _
    // Predicated region
    $region22: #{tpu_custom_call.1} parent=1 // pred_check
      _
    $region23: #{tpu_custom_call.1} parent=1 // pred_check_branch
      %62 = sbr.rel (0) target = $region25
    $region24: #{tpu_custom_call.1} parent=1 // pred_region
      _
    $region25: #{tpu_custom_call.1} parent=1 // pred_fallthru
      _
    // Predicated region
    $region26: #{tpu_custom_call.1} parent=1 // pred_check
      _
    $region27: #{tpu_custom_call.1} parent=1 // pred_check_branch
      %64 = sbr.rel (0) target = $region29
    $region28: #{tpu_custom_call.1} parent=1 // pred_region
      %66 = vsyncadd [#allocation6], 0
      %s67 = sshll.u32 %s6, 4
      %s68 = int_to_ptr.hbm [resolvable:$true] %s67
      %s69 = sshll.u32 [#allocation7], 4
      %s70 = int_to_ptr.vmem [resolvable:$true] %s69
      %75 = dma.hbm_to_vmem [thread:$0]  %s68, 1024, %s70, [#allocation6], 64, 64, 4
    $region29: #{tpu_custom_call.1} parent=1 // pred_fallthru
      _
    // Predicated region
    $region30: #{tpu_custom_call.1} parent=1 // pred_check
      _
    $region31: #{tpu_custom_call.1} parent=1 // pred_check_branch
      %77 = sbr.rel (0) target = $region33
    $region32: #{tpu_custom_call.1} parent=1 // pred_region
      %79 = vsyncadd [#allocation9], 0
      %s80 = sshll.u32 %s7, 4
      %s81 = int_to_ptr.hbm [resolvable:$true] %s80
      %s82 = sshll.u32 [#allocation8], 4
      %s83 = int_to_ptr.vmem [resolvable:$true] %s82
      %88 = dma.hbm_to_vmem [thread:$0]  %s81, 1024, %s83, [#allocation9], 128, 128, 8
    $region33: #{tpu_custom_call.1} parent=1 // pred_fallthru
      _
    // Predicated region
    $region34: #{tpu_custom_call.1} parent=1 // pred_check
      _
    $region35: #{tpu_custom_call.1} parent=1 // pred_check_branch
      %90 = sbr.rel (0) target = $region37
    $region36: #{tpu_custom_call.1} parent=1 // pred_region
      %92 = vsyncadd [#allocation9], 0
      %s93 = sshll.u32 %s8, 4
      %s94 = int_to_ptr.hbm [resolvable:$true] %s93
      %s95 = sshll.u32 [#allocation10], 4
      %s96 = int_to_ptr.vmem [resolvable:$true] %s95
      %101 = dma.hbm_to_vmem [thread:$0]  %s94, 1024, %s96, [#allocation9], 64, 64, 4
    $region37: #{tpu_custom_call.1} parent=1 // pred_fallthru
      _
    // Predicated region
    $region38: #{tpu_custom_call.1} parent=1 // pred_check
      _
    $region39: #{tpu_custom_call.1} parent=1 // pred_check_branch
      %103 = sbr.rel (0) target = $region41
    $region40: #{tpu_custom_call.1} parent=1 // pred_region
      _
    $region41: #{tpu_custom_call.1} parent=1 // pred_fallthru
      _
    // Predicated region
    $region42: #{tpu_custom_call.1} parent=1 // pred_check
      _
    $region43: #{tpu_custom_call.1} parent=1 // pred_check_branch
      %105 = sbr.rel (0) target = $region45
    $region44: #{tpu_custom_call.1} parent=1 // pred_region
      _
    $region45: #{tpu_custom_call.1} parent=1 // pred_fallthru
      _
    // Predicated region
    $region46: #{tpu_custom_call.1} parent=1 // pred_check
      _
    $region47: #{tpu_custom_call.1} parent=1 // pred_check_branch
      %107 = sbr.rel (0) target = $region49
    $region48: #{tpu_custom_call.1} parent=1 // pred_region
      _
    $region49: #{tpu_custom_call.1} parent=1 // pred_fallthru
      _
    // Predicated region
    $region50: #{tpu_custom_call.1} parent=1 // pred_check
      _
    $region51: #{tpu_custom_call.1} parent=1 // pred_check_branch
      %109 = sbr.rel (0) target = $region53
    $region52: #{tpu_custom_call.1} parent=1 // pred_region
      %111 = vsyncadd [#allocation12], 0
      %s112 = sshll.u32 %s12, 4
      %s113 = int_to_ptr.hbm [resolvable:$true] %s112
      %s114 = sshll.u32 [#allocation11], 4
      %s115 = int_to_ptr.vmem [resolvable:$true] %s114
      %120 = dma.hbm_to_vmem [thread:$0]  %s113, 1024, %s115, [#allocation12], 64, 64, 4
    $region53: #{tpu_custom_call.1} parent=1 // pred_fallthru
      _
    // Predicated region
    $region54: #{tpu_custom_call.1} parent=1 // pred_check
      _
    $region55: #{tpu_custom_call.1} parent=1 // pred_check_branch
      %122 = sbr.rel (0) target = $region57
    $region56: #{tpu_custom_call.1} parent=1 // pred_region
      _
    $region57: #{tpu_custom_call.1} parent=1 // pred_fallthru
      _
    // Predicated region
    $region58: #{tpu_custom_call.1} parent=1 // pred_check
      _
    $region59: #{tpu_custom_call.1} parent=1 // pred_check_branch
      %124 = sbr.rel (0) target = $region61
    $region60: #{tpu_custom_call.1} parent=1 // pred_region
      %126 = vsyncadd [#allocation12], 0
      %s127 = sshll.u32 %s14, 4
      %s128 = int_to_ptr.hbm [resolvable:$true] %s127
      %s129 = sshll.u32 [#allocation13], 4
      %s130 = int_to_ptr.vmem [resolvable:$true] %s129
      %135 = dma.hbm_to_vmem [thread:$0]  %s128, 1024, %s130, [#allocation12], 64, 64, 4
    $region61: #{tpu_custom_call.1} parent=1 // pred_fallthru
      _
    // Predicated region
    $region62: #{tpu_custom_call.1} parent=1 // pred_check
      _
    $region63: #{tpu_custom_call.1} parent=1 // pred_check_branch
      %137 = sbr.rel (0) target = $region65
    $region64: #{tpu_custom_call.1} parent=1 // pred_region
      _
    $region65: #{tpu_custom_call.1} parent=1 // pred_fallthru
      _
    // Predicated region
    $region66: #{tpu_custom_call.1} parent=1 // pred_check
      _
    $region67: #{tpu_custom_call.1} parent=1 // pred_check_branch
      %139 = sbr.rel (0) target = $region69
    $region68: #{tpu_custom_call.1} parent=1 // pred_region
      %141 = vsyncadd [#allocation15], 0
      %s142 = sshll.u32 %s16, 4
      %s143 = int_to_ptr.hbm [resolvable:$true] %s142
      %s144 = sshll.u32 [#allocation14], 4
      %s145 = int_to_ptr.vmem [resolvable:$true] %s144
      %150 = dma.hbm_to_vmem [thread:$0]  %s143, 1024, %s145, [#allocation15], 64, 64, 4
    $region69: #{tpu_custom_call.1} parent=1 // pred_fallthru
      _
    // Predicated region
    $region70: #{tpu_custom_call.1} parent=1 // pred_check
      _
    $region71: #{tpu_custom_call.1} parent=1 // pred_check_branch
      %152 = sbr.rel (0) target = $region73
    $region72: #{tpu_custom_call.1} parent=1 // pred_region
      _
    $region73: #{tpu_custom_call.1} parent=1 // pred_fallthru
      _
    // Predicated region
    $region74: #{tpu_custom_call.1} parent=1 // pred_check
      _
    $region75: #{tpu_custom_call.1} parent=1 // pred_check_branch
      %154 = sbr.rel (0) target = $region77
    $region76: #{tpu_custom_call.1} parent=1 // pred_region
      %156 = dma.done [#allocation3], 256
    $region77: #{tpu_custom_call.1} parent=1 // pred_fallthru
      _
    // Predicated region
    $region78: #{tpu_custom_call.1} parent=1 // pred_check
      _
    $region79: #{tpu_custom_call.1} parent=1 // pred_check_branch
      %158 = sbr.rel (0) target = $region81
    $region80: #{tpu_custom_call.1} parent=1 // pred_region
      %160 = dma.done [#allocation6], 256
    $region81: #{tpu_custom_call.1} parent=1 // pred_fallthru
      _
    // Predicated region
    $region82: #{tpu_custom_call.1} parent=1 // pred_check
      _
    $region83: #{tpu_custom_call.1} parent=1 // pred_check_branch
      %162 = sbr.rel (0) target = $region85
    $region84: #{tpu_custom_call.1} parent=1 // pred_region
      %164 = dma.done [#allocation6], 1024
    $region85: #{tpu_custom_call.1} parent=1 // pred_fallthru
      _
    // Predicated region
    $region86: #{tpu_custom_call.1} parent=1 // pred_check
      _
    $region87: #{tpu_custom_call.1} parent=1 // pred_check_branch
      %166 = sbr.rel (0) target = $region89
    $region88: #{tpu_custom_call.1} parent=1 // pred_region
      %168 = dma.done [#allocation9], 1024
    $region89: #{tpu_custom_call.1} parent=1 // pred_fallthru
      _
    // Predicated region
    $region90: #{tpu_custom_call.1} parent=1 // pred_check
      _
    $region91: #{tpu_custom_call.1} parent=1 // pred_check_branch
      %170 = sbr.rel (0) target = $region93
    $region92: #{tpu_custom_call.1} parent=1 // pred_region
      %172 = dma.done [#allocation9], 1024
    $region93: #{tpu_custom_call.1} parent=1 // pred_fallthru
      _
    // Predicated region
    $region94: #{tpu_custom_call.1} parent=1 // pred_check
      _
    $region95: #{tpu_custom_call.1} parent=1 // pred_check_branch
      %174 = sbr.rel (0) target = $region97
    $region96: #{tpu_custom_call.1} parent=1 // pred_region
      %176 = dma.done [#allocation12], 1024
    $region97: #{tpu_custom_call.1} parent=1 // pred_fallthru
      _
    // Predicated region
    $region98: #{tpu_custom_call.1} parent=1 // pred_check
      _
    $region99: #{tpu_custom_call.1} parent=1 // pred_check_branch
      %178 = sbr.rel (0) target = $region101
    $region100: #{tpu_custom_call.1} parent=1 // pred_region
      %180 = dma.done [#allocation12], 1024
    $region101: #{tpu_custom_call.1} parent=1 // pred_fallthru
      _
    // Predicated region
    $region102: #{tpu_custom_call.1} parent=1 // pred_check
      _
    $region103: #{tpu_custom_call.1} parent=1 // pred_check_branch
      %182 = sbr.rel (0) target = $region105
    $region104: #{tpu_custom_call.1} parent=1 // pred_region
      %184 = dma.done [#allocation15], 1024
    $region105: #{tpu_custom_call.1} parent=1 // pred_fallthru
      _
    %v186 = vld [vmem:[#allocation2] sm:$0xff]
    %v187 = vld [vmem:[#allocation2 + $0x8] sm:$0xff]
    %v188 = vld [vmem:[#allocation5] sm:$0xf]
    %v189 = vld [vmem:[#allocation5 + $0x4] sm:$0xf]
    %v190 = vld [vmem:[#allocation5 + $0x8] sm:$0xf]
    %v191 = vld [vmem:[#allocation5 + $0xc] sm:$0xf]
    %v192 = vunpack.c.l.bf16 %v188
    %v193 = vunpack.c.l.bf16 %v189
    %v194 = vunpack.c.l.bf16 %v190
    %v195 = vunpack.c.l.bf16 %v191
    %v196 = vld [vmem:[%s2] sm:$0x1]
    %v197 = vld [vmem:[%s3] sm:$0x1]
    %198 = vadd.xlane.f32.xlu0 %v186
    %v199 = vpop.xlane.xlu0 %198
    %200 = vadd.xlane.f32.xlu0 %v187
    %v201 = vpop.xlane.xlu0 %200
    %v202 = vmul.f32 %v199, 0.03125
    %v203 = vmul.f32 %v201, 0.03125
    %v204 = vmul.f32 %v186, %v186
    %v205 = vmul.f32 %v187, %v187
    %206 = vadd.xlane.f32.xlu0 %v204
    %v207 = vpop.xlane.xlu0 %206
    %208 = vadd.xlane.f32.xlu0 %v205
    %v209 = vpop.xlane.xlu0 %208
    %v210 = vmul.f32 %v207, 0.03125
    %v211 = vmul.f32 %v209, 0.03125
    %v212 = vmul.f32 %v202, %v202
    %v213 = vmul.f32 %v203, %v203
    %v214 = vsub.f32 %v210, %v212
    %v215 = vsub.f32 %v211, %v213
    %v216 = vsub.f32 %v186, %v202
    %v217 = vsub.f32 %v187, %v203
    %v218 = vadd.f32 %v214, 1e-05
    %v219 = vadd.f32 %v215, 1e-05
    %v220 = vrsqrt.pop %v218
    %v221 = vmul.f32 %v220, %v218
    %v222 = vmul.f32 %v221, %v220
    %v223 = vmul.f32 0.5, %v222
    %v224 = vsub.f32 1.5, %v223
    %v225 = vmul.f32 %v220, %v224
    %vm226 = vweird.f32 %v218
    %vm227 = vweird.f32 %v220
    %vm228 = vmor %vm226, %vm227
    %v229 = vsel %vm228, %v220, %v225
    %v230 = vrsqrt.pop %v219
    %v231 = vmul.f32 %v230, %v219
    %v232 = vmul.f32 %v231, %v230
    %v233 = vmul.f32 0.5, %v232
    %v234 = vsub.f32 1.5, %v233
    %v235 = vmul.f32 %v230, %v234
    %vm236 = vweird.f32 %v219
    %vm237 = vweird.f32 %v230
    %vm238 = vmor %vm236, %vm237
    %v239 = vsel %vm238, %v230, %v235
    %v240 = vmul.f32 %v216, %v229
    %v241 = vmul.f32 %v217, %v239
    %v243 = vperm.slane %v196, 0
    %v245 = vmul.f32 %v240, %v243
    %v246 = vmul.f32 %v241, %v243
    %v248 = vperm.slane %v197, 0
    %v250 = vadd.f32 %v245, %v248
    %v251 = vadd.f32 %v246, %v248
    %v252 = vld [vmem:[%s4] sm:$0x1]
    %v253 = vld [vmem:[%s5] sm:$0x1]
    %vm254 = vcmask 523264
    %v255 = vsel %vm254, %v192, 0.0
    %256 = vadd.xlane.f32.xlu0 %v255
    %v257 = vpop.xlane.xlu0 %256
    %v258 = vsel %vm254, %v193, 0.0
    %259 = vadd.xlane.f32.xlu0 %v258
    %v260 = vpop.xlane.xlu0 %259
    %v261 = vsel %vm254, %v194, 0.0
    %262 = vadd.xlane.f32.xlu0 %v261
    %v263 = vpop.xlane.xlu0 %262
    %v264 = vsel %vm254, %v195, 0.0
    %265 = vadd.xlane.f32.xlu0 %v264
    %v266 = vpop.xlane.xlu0 %265
    %v267 = vmul.f32 %v257, 0.015625
    %v268 = vmul.f32 %v260, 0.015625
    %v269 = vmul.f32 %v263, 0.015625
    %v270 = vmul.f32 %v266, 0.015625
    %v271 = vmul.f32 %v192, %v192
    %v272 = vmul.f32 %v193, %v193
    %v273 = vmul.f32 %v194, %v194
    %v274 = vmul.f32 %v195, %v195
    %v275 = vsel %vm254, %v271, 0.0
    %276 = vadd.xlane.f32.xlu0 %v275
    %v277 = vpop.xlane.xlu0 %276
    %v278 = vsel %vm254, %v272, 0.0
    %279 = vadd.xlane.f32.xlu0 %v278
    %v280 = vpop.xlane.xlu0 %279
    %v281 = vsel %vm254, %v273, 0.0
    %282 = vadd.xlane.f32.xlu0 %v281
    %v283 = vpop.xlane.xlu0 %282
    %v284 = vsel %vm254, %v274, 0.0
    %285 = vadd.xlane.f32.xlu0 %v284
    %v286 = vpop.xlane.xlu0 %285
    %v287 = vmul.f32 %v277, 0.015625
    %v288 = vmul.f32 %v280, 0.015625
    %v289 = vmul.f32 %v283, 0.015625
    %v290 = vmul.f32 %v286, 0.015625
    %v291 = vmul.f32 %v267, %v267
    %v292 = vmul.f32 %v268, %v268
    %v293 = vmul.f32 %v269, %v269
    %v294 = vmul.f32 %v270, %v270
    %v295 = vsub.f32 %v287, %v291
    %v296 = vsub.f32 %v288, %v292
    %v297 = vsub.f32 %v289, %v293
    %v298 = vsub.f32 %v290, %v294
    %v299 = vsub.f32 %v192, %v267
    %v300 = vsub.f32 %v193, %v268
    %v301 = vsub.f32 %v194, %v269
    %v302 = vsub.f32 %v195, %v270
    %v303 = vadd.f32 %v295, 1e-05
    %v304 = vadd.f32 %v296, 1e-05
    %v305 = vadd.f32 %v297, 1e-05
    %v306 = vadd.f32 %v298, 1e-05
    %v307 = vrsqrt.pop %v303
    %v308 = vmul.f32 %v307, %v303
    %v309 = vmul.f32 %v308, %v307
    %v310 = vmul.f32 0.5, %v309
    %v311 = vsub.f32 1.5, %v310
    %v312 = vmul.f32 %v307, %v311
    %vm313 = vweird.f32 %v303
    %vm314 = vweird.f32 %v307
    %vm315 = vmor %vm313, %vm314
    %v316 = vsel %vm315, %v307, %v312
    %v317 = vrsqrt.pop %v304
    %v318 = vmul.f32 %v317, %v304
    %v319 = vmul.f32 %v318, %v317
    %v320 = vmul.f32 0.5, %v319
    %v321 = vsub.f32 1.5, %v320
    %v322 = vmul.f32 %v317, %v321
    %vm323 = vweird.f32 %v304
    %vm324 = vweird.f32 %v317
    %vm325 = vmor %vm323, %vm324
    %v326 = vsel %vm325, %v317, %v322
    %v327 = vrsqrt.pop %v305
    %v328 = vmul.f32 %v327, %v305
    %v329 = vmul.f32 %v328, %v327
    %v330 = vmul.f32 0.5, %v329
    %v331 = vsub.f32 1.5, %v330
    %v332 = vmul.f32 %v327, %v331
    %vm333 = vweird.f32 %v305
    %vm334 = vweird.f32 %v327
    %vm335 = vmor %vm333, %vm334
    %v336 = vsel %vm335, %v327, %v332
    %v337 = vrsqrt.pop %v306
    %v338 = vmul.f32 %v337, %v306
    %v339 = vmul.f32 %v338, %v337
    %v340 = vmul.f32 0.5, %v339
    %v341 = vsub.f32 1.5, %v340
    %v342 = vmul.f32 %v337, %v341
    %vm343 = vweird.f32 %v306
    %vm344 = vweird.f32 %v337
    %vm345 = vmor %vm343, %vm344
    %v346 = vsel %vm345, %v337, %v342
    %v347 = vmul.f32 %v299, %v316
    %v348 = vmul.f32 %v300, %v326
    %v349 = vmul.f32 %v301, %v336
    %v350 = vmul.f32 %v302, %v346
    %v352 = vperm.slane %v252, 0
    %v354 = vmul.f32 %v347, %v352
    %v355 = vmul.f32 %v348, %v352
    %v356 = vmul.f32 %v349, %v352
    %v357 = vmul.f32 %v350, %v352
    %v359 = vperm.slane %v253, 0
    %v361 = vadd.f32 %v354, %v359
    %v362 = vadd.f32 %v355, %v359
    %v363 = vadd.f32 %v356, %v359
    %v364 = vadd.f32 %v357, %v359
    %v365 = vpack.c.bf16 %v251, %v250
    %v366 = vld [vmem:[#allocation7] sm:$0xf]
    %v367 = vld [vmem:[#allocation7 + $0x4] sm:$0xf]
    %v368 = vld [vmem:[#allocation7 + $0x8] sm:$0xf]
    %v369 = vld [vmem:[#allocation7 + $0xc] sm:$0xf]
    %v370 = vld [vmem:[#allocation7 + $0x10] sm:$0xf]
    %v371 = vld [vmem:[#allocation7 + $0x14] sm:$0xf]
    %v372 = vld [vmem:[#allocation7 + $0x18] sm:$0xf]
    %v373 = vld [vmem:[#allocation7 + $0x1c] sm:$0xf]
    %v374 = vld [vmem:[#allocation7 + $0x20] sm:$0xf]
    %v375 = vld [vmem:[#allocation7 + $0x24] sm:$0xf]
    %v376 = vld [vmem:[#allocation7 + $0x28] sm:$0xf]
    %v377 = vld [vmem:[#allocation7 + $0x2c] sm:$0xf]
    %v378 = vld [vmem:[#allocation7 + $0x30] sm:$0xf]
    %v379 = vld [vmem:[#allocation7 + $0x34] sm:$0xf]
    %v380 = vld [vmem:[#allocation7 + $0x38] sm:$0xf]
    %v381 = vld [vmem:[#allocation7 + $0x3c] sm:$0xf]
    %v398 = vunpack.c.l.b16 %v366
    %v399 = vunpack.c.l.b16 %v367
    %v400 = vunpack.c.l.b16 %v368
    %v401 = vunpack.c.l.b16 %v369
    %v402 = vunpack.c.l.b16 %v370
    %v403 = vunpack.c.l.b16 %v371
    %v404 = vunpack.c.l.b16 %v372
    %v405 = vunpack.c.l.b16 %v373
    %v406 = vunpack.c.l.b16 %v374
    %v407 = vunpack.c.l.b16 %v375
    %v408 = vunpack.c.l.b16 %v376
    %v409 = vunpack.c.l.b16 %v377
    %v410 = vunpack.c.l.b16 %v378
    %v411 = vunpack.c.l.b16 %v379
    %v412 = vunpack.c.l.b16 %v380
    %v413 = vunpack.c.l.b16 %v381
    %v414 = vpack.c.b16 %v399, %v398
    %v415 = vpack.c.b16 %v401, %v400
    %v416 = vpack.c.b16 %v403, %v402
    %v417 = vpack.c.b16 %v405, %v404
    %v418 = vpack.c.b16 %v407, %v406
    %v419 = vpack.c.b16 %v409, %v408
    %v420 = vpack.c.b16 %v411, %v410
    %v421 = vpack.c.b16 %v413, %v412
    %430 = vmatpush.bf16.msra.mxu0 %v421
    %431 = vmatpush.bf16.msra.mxu0 %v420
    %432 = vmatpush.bf16.msra.mxu0 %v419
    %433 = vmatpush.bf16.msra.mxu0 %v418
    %434 = vmatpush.bf16.msra.mxu0 %v417
    %435 = vmatpush.bf16.msra.mxu0 %v416
    %436 = vmatpush.bf16.msra.mxu0 %v415
    %437 = vmatpush.bf16.msra.mxu0 %v414
    %438 = vmatmul.bf16.gmra.mxu0 %v365
    %v439 = vpop.f32.mrf.mxu0
    %v440 = vadd.f32 0.0, %v439
    %v441 = vpop.f32.mrf.mxu0
    %v442 = vadd.f32 0.0, %v441
    %443 = vdwg.mxu0
    %v444 = vmul.f32 %v440, 0.125
    %v445 = vmul.f32 %v442, 0.125
    %v446 = vpack.c.bf16 %v362, %v361
    %v447 = vpack.c.bf16 %v364, %v363
    %v448 = vld [vmem:[#allocation8] sm:$0xff]
    %v449 = vld [vmem:[#allocation8 + $0x8] sm:$0xff]
    %v450 = vld [vmem:[#allocation8 + $0x10] sm:$0xff]
    %v451 = vld [vmem:[#allocation8 + $0x18] sm:$0xff]
    %v452 = vld [vmem:[#allocation8 + $0x20] sm:$0xff]
    %v453 = vld [vmem:[#allocation8 + $0x28] sm:$0xff]
    %v454 = vld [vmem:[#allocation8 + $0x30] sm:$0xff]
    %v455 = vld [vmem:[#allocation8 + $0x38] sm:$0xff]
    %v464 = vunpack.c.l.b16 %v448
    %v465 = vunpack.c.h.b16 %v448
    %v466 = vunpack.c.l.b16 %v449
    %v467 = vunpack.c.h.b16 %v449
    %v468 = vunpack.c.l.b16 %v450
    %v469 = vunpack.c.h.b16 %v450
    %v470 = vunpack.c.l.b16 %v451
    %v471 = vunpack.c.h.b16 %v451
    %v472 = vunpack.c.l.b16 %v452
    %v473 = vunpack.c.h.b16 %v452
    %v474 = vunpack.c.l.b16 %v453
    %v475 = vunpack.c.h.b16 %v453
    %v476 = vunpack.c.l.b16 %v454
    %v477 = vunpack.c.h.b16 %v454
    %v478 = vunpack.c.l.b16 %v455
    %v479 = vunpack.c.h.b16 %v455
    %v480 = vpack.c.b16 %v466, %v464
    %v481 = vpack.c.b16 %v467, %v465
    %v482 = vpack.c.b16 %v470, %v468
    %v483 = vpack.c.b16 %v471, %v469
    %v484 = vpack.c.b16 %v474, %v472
    %v485 = vpack.c.b16 %v475, %v473
    %v486 = vpack.c.b16 %v478, %v476
    %v487 = vpack.c.b16 %v479, %v477
    %v497 = vsel %vm254, %v446, 0
    %v500 = vsel %vm254, %v447, 0
    %502 = vmatpush.bf16.msra.mxu0 0
    %503 = vmatpush.bf16.msra.mxu0 0
    %504 = vmatpush.bf16.msra.mxu0 0
    %505 = vmatpush.bf16.msra.mxu0 0
    %506 = vmatpush.bf16.msra.mxu0 %v486
    %507 = vmatpush.bf16.msra.mxu0 %v484
    %508 = vmatpush.bf16.msra.mxu0 %v482
    %509 = vmatpush.bf16.msra.mxu0 %v480
    %510 = vmatmul.bf16.gmra.mxu0 %v497
    %v511 = vpop.f32.mrf.mxu0
    %v512 = vadd.f32 0.0, %v511
    %v513 = vpop.f32.mrf.mxu0
    %v514 = vadd.f32 0.0, %v513
    %515 = vmatmul.bf16.gmra.mxu0 %v500
    %v516 = vpop.f32.mrf.mxu0
    %v517 = vadd.f32 0.0, %v516
    %v518 = vpop.f32.mrf.mxu0
    %v519 = vadd.f32 0.0, %v518
    %520 = vdwg.mxu0
    %521 = vmatpush.bf16.msra.mxu0 0
    %522 = vmatpush.bf16.msra.mxu0 0
    %523 = vmatpush.bf16.msra.mxu0 0
    %524 = vmatpush.bf16.msra.mxu0 0
    %525 = vmatpush.bf16.msra.mxu0 %v487
    %526 = vmatpush.bf16.msra.mxu0 %v485
    %527 = vmatpush.bf16.msra.mxu0 %v483
    %528 = vmatpush.bf16.msra.mxu0 %v481
    %529 = vmatmul.bf16.gmra.mxu0 %v497
    %v530 = vpop.f32.mrf.mxu0
    %v531 = vadd.f32 0.0, %v530
    %v532 = vpop.f32.mrf.mxu0
    %v533 = vadd.f32 0.0, %v532
    %534 = vmatmul.bf16.gmra.mxu0 %v500
    %v535 = vpop.f32.mrf.mxu0
    %v536 = vadd.f32 0.0, %v535
    %v537 = vpop.f32.mrf.mxu0
    %v538 = vadd.f32 0.0, %v537
    %539 = vdwg.mxu0
    %v540 = vpack.c.bf16 %v444, %v444
    %v541 = vpack.c.bf16 %v445, %v445
    %v542 = vpack.c.bf16 %v512, %v512
    %v543 = vpack.c.bf16 %v514, %v514
    %v544 = vpack.c.bf16 %v517, %v517
    %v545 = vpack.c.bf16 %v519, %v519
    %v548 = vunpack.c.l.b16 %v542
    %v549 = vunpack.c.l.b16 %v543
    %v550 = vpack.c.b16 %v549, %v548
    %552 = vmatpush.bf16.xpose.msra.mxu0 0
    %553 = vmatpush.bf16.xpose.msra.mxu0 0
    %554 = vmatpush.bf16.xpose.msra.mxu0 0
    %555 = vmatpush.bf16.xpose.msra.mxu0 0
    %556 = vmatpush.bf16.xpose.msra.mxu0 0
    %557 = vmatpush.bf16.xpose.msra.mxu0 0
    %558 = vmatpush.bf16.xpose.msra.mxu0 0
    %559 = vmatpush.bf16.xpose.msra.mxu0 %v550
    %560 = vmatmul.bf16.gmra.mxu0 %v540
    %v561 = vpop.f32.mrf.mxu0
    %v562 = vadd.f32 0.0, %v561
    %v563 = vpop.f32.mrf.mxu0
    %564 = vdwg.mxu0
    %v567 = vunpack.c.l.b16 %v544
    %v568 = vunpack.c.l.b16 %v545
    %v569 = vpack.c.b16 %v568, %v567
    %571 = vmatpush.bf16.xpose.msra.mxu0 0
    %572 = vmatpush.bf16.xpose.msra.mxu0 0
    %573 = vmatpush.bf16.xpose.msra.mxu0 0
    %574 = vmatpush.bf16.xpose.msra.mxu0 0
    %575 = vmatpush.bf16.xpose.msra.mxu0 0
    %576 = vmatpush.bf16.xpose.msra.mxu0 0
    %577 = vmatpush.bf16.xpose.msra.mxu0 0
    %578 = vmatpush.bf16.xpose.msra.mxu0 %v569
    %579 = vmatmul.bf16.gmra.mxu0 %v541
    %v580 = vpop.f32.mrf.mxu0
    %v581 = vadd.f32 0.0, %v580
    %v582 = vpop.f32.mrf.mxu0
    %583 = vdwg.mxu0
    %vm584 = vcmask 130048
    %v585 = vsel %vm584, %v562, -inf
    %586 = vmax.xlane.f32.xlu0 %v585
    %v587 = vpop.xlane.xlu0 %586
    %v588 = vsel %vm584, %v581, -inf
    %589 = vmax.xlane.f32.xlu0 %v588
    %v590 = vpop.xlane.xlu0 %589
    %v591 = vsub.f32 %v562, %v587
    %v592 = vsub.f32 %v581, %v590
    %v593 = vmul.f32 %v591, 1.442695
    %v594 = vpow.pop %v593
    %v595 = vmul.f32 %v592, 1.442695
    %v596 = vpow.pop %v595
    %v597 = vsel %vm584, %v594, 0.0
    %598 = vadd.xlane.f32.xlu0 %v597
    %v599 = vpop.xlane.xlu0 %598
    %v600 = vsel %vm584, %v596, 0.0
    %601 = vadd.xlane.f32.xlu0 %v600
    %v602 = vpop.xlane.xlu0 %601
    %v603 = vrcp.pop %v599
    %v604 = vrcp.pop %v602
    %v605 = vmul.f32 %v594, %v603
    %v606 = vmul.f32 %v596, %v604
    %v607 = vpack.c.bf16 %v605, %v605
    %v608 = vpack.c.bf16 %v606, %v606
    %v609 = vpack.c.bf16 %v531, %v531
    %v610 = vpack.c.bf16 %v533, %v533
    %v611 = vpack.c.bf16 %v536, %v536
    %v612 = vpack.c.bf16 %v538, %v538
    %v615 = vunpack.c.l.b16 %v609
    %v616 = vunpack.c.l.b16 %v610
    %v617 = vpack.c.b16 %v616, %v615
    %v620 = vsel %vm584, %v607, 0
    %622 = vmatpush.bf16.msra.mxu0 0
    %623 = vmatpush.bf16.msra.mxu0 0
    %624 = vmatpush.bf16.msra.mxu0 0
    %625 = vmatpush.bf16.msra.mxu0 0
    %626 = vmatpush.bf16.msra.mxu0 0
    %627 = vmatpush.bf16.msra.mxu0 0
    %628 = vmatpush.bf16.msra.mxu0 0
    %629 = vmatpush.bf16.msra.mxu0 %v617
    %630 = vmatmul.bf16.gmra.mxu0 %v620
    %v631 = vpop.f32.mrf.mxu0
    %v632 = vadd.f32 0.0, %v631
    %v633 = vpop.f32.mrf.mxu0
    %634 = vdwg.mxu0
    %v637 = vunpack.c.l.b16 %v611
    %v638 = vunpack.c.l.b16 %v612
    %v639 = vpack.c.b16 %v638, %v637
    %v642 = vsel %vm584, %v608, 0
    %644 = vmatpush.bf16.msra.mxu0 0
    %645 = vmatpush.bf16.msra.mxu0 0
    %646 = vmatpush.bf16.msra.mxu0 0
    %647 = vmatpush.bf16.msra.mxu0 0
    %648 = vmatpush.bf16.msra.mxu0 0
    %649 = vmatpush.bf16.msra.mxu0 0
    %650 = vmatpush.bf16.msra.mxu0 0
    %651 = vmatpush.bf16.msra.mxu0 %v639
    %652 = vmatmul.bf16.gmra.mxu0 %v642
    %v653 = vpop.f32.mrf.mxu0
    %v654 = vadd.f32 0.0, %v653
    %v655 = vpop.f32.mrf.mxu0
    %656 = vdwg.mxu0
    %v657 = vpack.c.bf16 %v654, %v632
    %v658 = vld [vmem:[#allocation10] sm:$0xf]
    %v659 = vld [vmem:[#allocation10 + $0x4] sm:$0xf]
    %v660 = vld [vmem:[#allocation10 + $0x8] sm:$0xf]
    %v661 = vld [vmem:[#allocation10 + $0xc] sm:$0xf]
    %v662 = vld [vmem:[#allocation10 + $0x10] sm:$0xf]
    %v663 = vld [vmem:[#allocation10 + $0x14] sm:$0xf]
    %v664 = vld [vmem:[#allocation10 + $0x18] sm:$0xf]
    %v665 = vld [vmem:[#allocation10 + $0x1c] sm:$0xf]
    %v666 = vld [vmem:[#allocation10 + $0x20] sm:$0xf]
    %v667 = vld [vmem:[#allocation10 + $0x24] sm:$0xf]
    %v668 = vld [vmem:[#allocation10 + $0x28] sm:$0xf]
    %v669 = vld [vmem:[#allocation10 + $0x2c] sm:$0xf]
    %v670 = vld [vmem:[#allocation10 + $0x30] sm:$0xf]
    %v671 = vld [vmem:[#allocation10 + $0x34] sm:$0xf]
    %v672 = vld [vmem:[#allocation10 + $0x38] sm:$0xf]
    %v673 = vld [vmem:[#allocation10 + $0x3c] sm:$0xf]
    %v674 = vld [vmem:[%s9] sm:$0x1]
    %v676 = vperm.slane %v674, 0
    %v694 = vunpack.c.l.b16 %v658
    %v695 = vunpack.c.l.b16 %v659
    %v696 = vunpack.c.l.b16 %v660
    %v697 = vunpack.c.l.b16 %v661
    %v698 = vunpack.c.l.b16 %v662
    %v699 = vunpack.c.l.b16 %v663
    %v700 = vunpack.c.l.b16 %v664
    %v701 = vunpack.c.l.b16 %v665
    %v702 = vunpack.c.l.b16 %v666
    %v703 = vunpack.c.l.b16 %v667
    %v704 = vunpack.c.l.b16 %v668
    %v705 = vunpack.c.l.b16 %v669
    %v706 = vunpack.c.l.b16 %v670
    %v707 = vunpack.c.l.b16 %v671
    %v708 = vunpack.c.l.b16 %v672
    %v709 = vunpack.c.l.b16 %v673
    %v710 = vpack.c.b16 %v695, %v694
    %v711 = vpack.c.b16 %v697, %v696
    %v712 = vpack.c.b16 %v699, %v698
    %v713 = vpack.c.b16 %v701, %v700
    %v714 = vpack.c.b16 %v703, %v702
    %v715 = vpack.c.b16 %v705, %v704
    %v716 = vpack.c.b16 %v707, %v706
    %v717 = vpack.c.b16 %v709, %v708
    %726 = vmatpush.bf16.msra.mxu0 %v717
    %727 = vmatpush.bf16.msra.mxu0 %v716
    %728 = vmatpush.bf16.msra.mxu0 %v715
    %729 = vmatpush.bf16.msra.mxu0 %v714
    %730 = vmatpush.bf16.msra.mxu0 %v713
    %731 = vmatpush.bf16.msra.mxu0 %v712
    %732 = vmatpush.bf16.msra.mxu0 %v711
    %733 = vmatpush.bf16.msra.mxu0 %v710
    %734 = vmatmul.bf16.gmra.mxu0 %v657
    %v735 = vpop.f32.mrf.mxu0
    %v736 = vadd.f32 %v676, %v735
    %v737 = vpop.f32.mrf.mxu0
    %v738 = vadd.f32 %v676, %v737
    %739 = vdwg.mxu0
    %v740 = vld [vmem:[%s10] sm:$0x1]
    %v741 = vld [vmem:[%s11] sm:$0x1]
    %742 = vadd.xlane.f32.xlu0 %v736
    %v743 = vpop.xlane.xlu0 %742
    %744 = vadd.xlane.f32.xlu0 %v738
    %v745 = vpop.xlane.xlu0 %744
    %v746 = vmul.f32 %v743, 0.03125
    %v747 = vmul.f32 %v745, 0.03125
    %v748 = vmul.f32 %v736, %v736
    %v749 = vmul.f32 %v738, %v738
    %750 = vadd.xlane.f32.xlu0 %v748
    %v751 = vpop.xlane.xlu0 %750
    %752 = vadd.xlane.f32.xlu0 %v749
    %v753 = vpop.xlane.xlu0 %752
    %v754 = vmul.f32 %v751, 0.03125
    %v755 = vmul.f32 %v753, 0.03125
    %v756 = vmul.f32 %v746, %v746
    %v757 = vmul.f32 %v747, %v747
    %v758 = vsub.f32 %v754, %v756
    %v759 = vsub.f32 %v755, %v757
    %v760 = vsub.f32 %v736, %v746
    %v761 = vsub.f32 %v738, %v747
    %v762 = vadd.f32 %v758, 1e-05
    %v763 = vadd.f32 %v759, 1e-05
    %v764 = vrsqrt.pop %v762
    %v765 = vmul.f32 %v764, %v762
    %v766 = vmul.f32 %v765, %v764
    %v767 = vmul.f32 0.5, %v766
    %v768 = vsub.f32 1.5, %v767
    %v769 = vmul.f32 %v764, %v768
    %vm770 = vweird.f32 %v762
    %vm771 = vweird.f32 %v764
    %vm772 = vmor %vm770, %vm771
    %v773 = vsel %vm772, %v764, %v769
    %v774 = vrsqrt.pop %v763
    %v775 = vmul.f32 %v774, %v763
    %v776 = vmul.f32 %v775, %v774
    %v777 = vmul.f32 0.5, %v776
    %v778 = vsub.f32 1.5, %v777
    %v779 = vmul.f32 %v774, %v778
    %vm780 = vweird.f32 %v763
    %vm781 = vweird.f32 %v774
    %vm782 = vmor %vm780, %vm781
    %v783 = vsel %vm782, %v774, %v779
    %v784 = vmul.f32 %v760, %v773
    %v785 = vmul.f32 %v761, %v783
    %v787 = vperm.slane %v740, 0
    %v789 = vmul.f32 %v784, %v787
    %v790 = vmul.f32 %v785, %v787
    %v792 = vperm.slane %v741, 0
    %v794 = vadd.f32 %v789, %v792
    %v795 = vadd.f32 %v790, %v792
    %v796 = vpack.c.bf16 %v795, %v794
    %v797 = vld [vmem:[#allocation11] sm:$0xf]
    %v798 = vld [vmem:[#allocation11 + $0x4] sm:$0xf]
    %v799 = vld [vmem:[#allocation11 + $0x8] sm:$0xf]
    %v800 = vld [vmem:[#allocation11 + $0xc] sm:$0xf]
    %v801 = vld [vmem:[#allocation11 + $0x10] sm:$0xf]
    %v802 = vld [vmem:[#allocation11 + $0x14] sm:$0xf]
    %v803 = vld [vmem:[#allocation11 + $0x18] sm:$0xf]
    %v804 = vld [vmem:[#allocation11 + $0x1c] sm:$0xf]
    %v805 = vld [vmem:[#allocation11 + $0x20] sm:$0xf]
    %v806 = vld [vmem:[#allocation11 + $0x24] sm:$0xf]
    %v807 = vld [vmem:[#allocation11 + $0x28] sm:$0xf]
    %v808 = vld [vmem:[#allocation11 + $0x2c] sm:$0xf]
    %v809 = vld [vmem:[#allocation11 + $0x30] sm:$0xf]
    %v810 = vld [vmem:[#allocation11 + $0x34] sm:$0xf]
    %v811 = vld [vmem:[#allocation11 + $0x38] sm:$0xf]
    %v812 = vld [vmem:[#allocation11 + $0x3c] sm:$0xf]
    %v813 = vld [vmem:[%s13] sm:$0x1]
    %v815 = vperm.slane %v813, 0
    %v833 = vunpack.c.l.b16 %v797
    %v834 = vunpack.c.l.b16 %v798
    %v835 = vunpack.c.l.b16 %v799
    %v836 = vunpack.c.l.b16 %v800
    %v837 = vunpack.c.l.b16 %v801
    %v838 = vunpack.c.l.b16 %v802
    %v839 = vunpack.c.l.b16 %v803
    %v840 = vunpack.c.l.b16 %v804
    %v841 = vunpack.c.l.b16 %v805
    %v842 = vunpack.c.l.b16 %v806
    %v843 = vunpack.c.l.b16 %v807
    %v844 = vunpack.c.l.b16 %v808
    %v845 = vunpack.c.l.b16 %v809
    %v846 = vunpack.c.l.b16 %v810
    %v847 = vunpack.c.l.b16 %v811
    %v848 = vunpack.c.l.b16 %v812
    %v849 = vpack.c.b16 %v834, %v833
    %v850 = vpack.c.b16 %v836, %v835
    %v851 = vpack.c.b16 %v838, %v837
    %v852 = vpack.c.b16 %v840, %v839
    %v853 = vpack.c.b16 %v842, %v841
    %v854 = vpack.c.b16 %v844, %v843
    %v855 = vpack.c.b16 %v846, %v845
    %v856 = vpack.c.b16 %v848, %v847
    %865 = vmatpush.bf16.msra.mxu0 %v856
    %866 = vmatpush.bf16.msra.mxu0 %v855
    %867 = vmatpush.bf16.msra.mxu0 %v854
    %868 = vmatpush.bf16.msra.mxu0 %v853
    %869 = vmatpush.bf16.msra.mxu0 %v852
    %870 = vmatpush.bf16.msra.mxu0 %v851
    %871 = vmatpush.bf16.msra.mxu0 %v850
    %872 = vmatpush.bf16.msra.mxu0 %v849
    %873 = vmatmul.bf16.gmra.mxu0 %v796
    %v874 = vpop.f32.mrf.mxu0
    %v875 = vadd.f32 %v815, %v874
    %v876 = vpop.f32.mrf.mxu0
    %v877 = vadd.f32 %v815, %v876
    %878 = vdwg.mxu0
    %v879 = vmul.f32 %v875, 0.5
    %v880 = vmul.f32 %v877, 0.5
    %v881 = vmul.f32 %v875, 0.044715
    %v882 = vmul.f32 %v877, 0.044715
    %v883 = vmul.f32 %v881, %v875
    %v884 = vmul.f32 %v882, %v877
    %v885 = vmul.f32 %v883, %v875
    %v886 = vmul.f32 %v884, %v877
    %v887 = vadd.f32 %v875, %v885
    %v888 = vadd.f32 %v877, %v886
    %v889 = vmul.f32 %v887, 0.7978846
    %v890 = vmul.f32 %v888, 0.7978846
    %v891 = vtanh.pop %v889
    %v892 = vtanh.pop %v890
    %v893 = vadd.f32 %v891, 1.0
    %v894 = vadd.f32 %v892, 1.0
    %v895 = vmul.f32 %v879, %v893
    %v896 = vmul.f32 %v880, %v894
    %v897 = vpack.c.bf16 %v896, %v895
    %v898 = vld [vmem:[#allocation13] sm:$0xf]
    %v899 = vld [vmem:[#allocation13 + $0x4] sm:$0xf]
    %v900 = vld [vmem:[#allocation13 + $0x8] sm:$0xf]
    %v901 = vld [vmem:[#allocation13 + $0xc] sm:$0xf]
    %v902 = vld [vmem:[#allocation13 + $0x10] sm:$0xf]
    %v903 = vld [vmem:[#allocation13 + $0x14] sm:$0xf]
    %v904 = vld [vmem:[#allocation13 + $0x18] sm:$0xf]
    %v905 = vld [vmem:[#allocation13 + $0x1c] sm:$0xf]
    %v906 = vld [vmem:[#allocation13 + $0x20] sm:$0xf]
    %v907 = vld [vmem:[#allocation13 + $0x24] sm:$0xf]
    %v908 = vld [vmem:[#allocation13 + $0x28] sm:$0xf]
    %v909 = vld [vmem:[#allocation13 + $0x2c] sm:$0xf]
    %v910 = vld [vmem:[#allocation13 + $0x30] sm:$0xf]
    %v911 = vld [vmem:[#allocation13 + $0x34] sm:$0xf]
    %v912 = vld [vmem:[#allocation13 + $0x38] sm:$0xf]
    %v913 = vld [vmem:[#allocation13 + $0x3c] sm:$0xf]
    %v914 = vld [vmem:[%s15] sm:$0x1]
    %v916 = vperm.slane %v914, 0
    %v934 = vunpack.c.l.b16 %v898
    %v935 = vunpack.c.l.b16 %v899
    %v936 = vunpack.c.l.b16 %v900
    %v937 = vunpack.c.l.b16 %v901
    %v938 = vunpack.c.l.b16 %v902
    %v939 = vunpack.c.l.b16 %v903
    %v940 = vunpack.c.l.b16 %v904
    %v941 = vunpack.c.l.b16 %v905
    %v942 = vunpack.c.l.b16 %v906
    %v943 = vunpack.c.l.b16 %v907
    %v944 = vunpack.c.l.b16 %v908
    %v945 = vunpack.c.l.b16 %v909
    %v946 = vunpack.c.l.b16 %v910
    %v947 = vunpack.c.l.b16 %v911
    %v948 = vunpack.c.l.b16 %v912
    %v949 = vunpack.c.l.b16 %v913
    %v950 = vpack.c.b16 %v935, %v934
    %v951 = vpack.c.b16 %v937, %v936
    %v952 = vpack.c.b16 %v939, %v938
    %v953 = vpack.c.b16 %v941, %v940
    %v954 = vpack.c.b16 %v943, %v942
    %v955 = vpack.c.b16 %v945, %v944
    %v956 = vpack.c.b16 %v947, %v946
    %v957 = vpack.c.b16 %v949, %v948
    %966 = vmatpush.bf16.msra.mxu0 %v957
    %967 = vmatpush.bf16.msra.mxu0 %v956
    %968 = vmatpush.bf16.msra.mxu0 %v955
    %969 = vmatpush.bf16.msra.mxu0 %v954
    %970 = vmatpush.bf16.msra.mxu0 %v953
    %971 = vmatpush.bf16.msra.mxu0 %v952
    %972 = vmatpush.bf16.msra.mxu0 %v951
    %973 = vmatpush.bf16.msra.mxu0 %v950
    %974 = vmatmul.bf16.gmra.mxu0 %v897
    %v975 = vpop.f32.mrf.mxu0
    %v976 = vadd.f32 %v916, %v975
    %v977 = vpop.f32.mrf.mxu0
    %v978 = vadd.f32 %v916, %v977
    %979 = vdwg.mxu0
    %v980 = vadd.f32 %v736, %v976
    %v981 = vadd.f32 %v738, %v978
    %v982 = vpack.c.bf16 %v981, %v980
    %v983 = vld [vmem:[#allocation14] sm:$0xf]
    %v984 = vld [vmem:[#allocation14 + $0x4] sm:$0xf]
    %v985 = vld [vmem:[#allocation14 + $0x8] sm:$0xf]
    %v986 = vld [vmem:[#allocation14 + $0xc] sm:$0xf]
    %v987 = vld [vmem:[#allocation14 + $0x10] sm:$0xf]
    %v988 = vld [vmem:[#allocation14 + $0x14] sm:$0xf]
    %v989 = vld [vmem:[#allocation14 + $0x18] sm:$0xf]
    %v990 = vld [vmem:[#allocation14 + $0x1c] sm:$0xf]
    %v991 = vld [vmem:[#allocation14 + $0x20] sm:$0xf]
    %v992 = vld [vmem:[#allocation14 + $0x24] sm:$0xf]
    %v993 = vld [vmem:[#allocation14 + $0x28] sm:$0xf]
    %v994 = vld [vmem:[#allocation14 + $0x2c] sm:$0xf]
    %v995 = vld [vmem:[#allocation14 + $0x30] sm:$0xf]
    %v996 = vld [vmem:[#allocation14 + $0x34] sm:$0xf]
    %v997 = vld [vmem:[#allocation14 + $0x38] sm:$0xf]
    %v998 = vld [vmem:[#allocation14 + $0x3c] sm:$0xf]
    %v999 = vld [vmem:[%s17] sm:$0x1]
    %v1001 = vperm.slane %v999, 0
    %v1019 = vunpack.c.l.b16 %v983
    %v1020 = vunpack.c.l.b16 %v984
    %v1021 = vunpack.c.l.b16 %v985
    %v1022 = vunpack.c.l.b16 %v986
    %v1023 = vunpack.c.l.b16 %v987
    %v1024 = vunpack.c.l.b16 %v988
    %v1025 = vunpack.c.l.b16 %v989
    %v1026 = vunpack.c.l.b16 %v990
    %v1027 = vunpack.c.l.b16 %v991
    %v1028 = vunpack.c.l.b16 %v992
    %v1029 = vunpack.c.l.b16 %v993
    %v1030 = vunpack.c.l.b16 %v994
    %v1031 = vunpack.c.l.b16 %v995
    %v1032 = vunpack.c.l.b16 %v996
    %v1033 = vunpack.c.l.b16 %v997
    %v1034 = vunpack.c.l.b16 %v998
    %v1035 = vpack.c.b16 %v1020, %v1019
    %v1036 = vpack.c.b16 %v1022, %v1021
    %v1037 = vpack.c.b16 %v1024, %v1023
    %v1038 = vpack.c.b16 %v1026, %v1025
    %v1039 = vpack.c.b16 %v1028, %v1027
    %v1040 = vpack.c.b16 %v1030, %v1029
    %v1041 = vpack.c.b16 %v1032, %v1031
    %v1042 = vpack.c.b16 %v1034, %v1033
    %1051 = vmatpush.bf16.msra.mxu0 %v1042
    %1052 = vmatpush.bf16.msra.mxu0 %v1041
    %1053 = vmatpush.bf16.msra.mxu0 %v1040
    %1054 = vmatpush.bf16.msra.mxu0 %v1039
    %1055 = vmatpush.bf16.msra.mxu0 %v1038
    %1056 = vmatpush.bf16.msra.mxu0 %v1037
    %1057 = vmatpush.bf16.msra.mxu0 %v1036
    %1058 = vmatpush.bf16.msra.mxu0 %v1035
    %1059 = vmatmul.bf16.gmra.mxu0 %v982
    %v1060 = vpop.f32.mrf.mxu0
    %v1061 = vadd.f32 %v1001, %v1060
    %v1062 = vpop.f32.mrf.mxu0
    %v1063 = vadd.f32 %v1001, %v1062
    %1064 = vdwg.mxu0
    %1065 = vst [vmem:[#allocation16] sm:$0xff] %v1061
    %1066 = vst [vmem:[#allocation16 + $0x8] sm:$0xff] %v1063
    // Predicated region
    $region106: #{tpu_custom_call.1} parent=1 // pred_check
      _
    $region107: #{tpu_custom_call.1} parent=1 // pred_check_branch
      %1068 = sbr.rel (0) target = $region109
    $region108: #{tpu_custom_call.1} parent=1 // pred_region
      %1070 = vsyncadd [#allocation4], 0
      %s1071 = sshll.u32 [#allocation16], 4
      %s1072 = int_to_ptr.vmem [resolvable:$true] %s1071
      %s1073 = sshll.u32 %s18, 4
      %s1074 = int_to_ptr.hbm [resolvable:$true] %s1073
      %1079 = dma.vmem_to_hbm [thread:$0]  %s1072, 256, %s1074, [#allocation4], 128, 128, 8
    $region109: #{tpu_custom_call.1} parent=1 // pred_fallthru
      _
    // Predicated region
    $region110: #{tpu_custom_call.1} parent=1 // pred_check
      _
    $region111: #{tpu_custom_call.1} parent=1 // pred_check_branch
      %1081 = sbr.rel (0) target = $region113
    $region112: #{tpu_custom_call.1} parent=1 // pred_region
      %1083 = dma.done [#allocation4], 256
    $region113: #{tpu_custom_call.1} parent=1 // pred_fallthru
      _
    %1084 = vsyncpa [#allocation3], 1
    %1085 = vsyncpa [#allocation6], 1
    %1086 = vsyncpa [#allocation9], 1
    %1087 = vsyncpa [#allocation12], 1
    %1088 = vsyncpa [#allocation15], 1
    %1089 = vsyncpa [#allocation4], 1

</llo_original>
